<compile_context>
chip_gen: v7x
topology: tpu7x:2x2x1
jax: 0.10.0
libtpu: 0.0.40
codegen_flags: <defaults>
</compile_context>

<pallas_src>
import functools

import jax
import jax.numpy as jnp
from jax import lax
from jax.experimental import pallas as pl
from jax.experimental.pallas import tpu as pltpu


def _round_up(x, m):
    return -(-x // m) * m


def _self_attn_kernel(x_full_ref, x_tile_ref, wq_ref, bq_ref, wkv_ref, bkv_ref,
                      gamma_ref, o_ref, kt_ref, v_ref, *, cq_pad, n_valid):
    """One (batch, query-tile) grid step.

    x_full_ref: (C, N_pad) f32   -- full spatial extent (for K/V projection)
    x_tile_ref: (C, tq)   f32    -- query-tile slice of x (also the residual)
    wq_ref:  (cq_pad, C)  mxu    bq_ref:  (cq_pad, 1) f32
    wkv_ref: (cq_pad+C, C) mxu   bkv_ref: (cq_pad+C, 1) f32
    gamma_ref: (1,) f32 in SMEM
    kt_ref: (N_pad, cq_pad) mxu  scratch -- K stored transposed
    v_ref:  (C, N_pad)     mxu   scratch -- V
    """
    mxu_dtype = wq_ref.dtype
    qi = pl.program_id(1)
    n_pad = x_full_ref.shape[1]

    # ---- once per batch element: project K and V into VMEM scratch.
    @pl.when(qi == 0)
    def _():
        x_full = x_full_ref[...]                                     # (C, N_pad) f32
        kv = jnp.dot(wkv_ref[...], x_full.astype(mxu_dtype),
                     preferred_element_type=jnp.float32) + bkv_ref[...]
        # One-time O(Cq*N) transpose; makes both big matmuls MXU-natural.
        kt_ref[...] = kv[:cq_pad, :].T.astype(mxu_dtype)             # (N_pad, cq_pad)
        v_ref[...] = kv[cq_pad:, :].astype(mxu_dtype)                # (C, N_pad)

    # ---- per query tile.
    x_q = x_tile_ref[...]                                            # (C, tq) f32
    q = jnp.dot(wq_ref[...], x_q.astype(mxu_dtype),
                preferred_element_type=jnp.float32) + bq_ref[...]    # (cq_pad, tq)

    # energy^T[j, i] = sum_d k[d, j] * q[d, i]  -- keys on sublanes.
    energy = jnp.dot(kt_ref[...], q.astype(mxu_dtype),
                     preferred_element_type=jnp.float32)             # (N_pad, tq)

    m = jnp.max(energy, axis=0, keepdims=True)                       # (1, tq)
    p = jnp.exp(energy - m)                                          # (N_pad, tq) f32
    if n_valid < n_pad:                                              # static branch
        j = lax.broadcasted_iota(jnp.int32, p.shape, 0)
        p = jnp.where(j < n_valid, p, 0.0)
    l = jnp.sum(p, axis=0, keepdims=True)                            # (1, tq)

    # Deferred normalization: AV on unnormalized p, then scale (C, tq) result.
    out_u = jnp.dot(v_ref[...], p.astype(mxu_dtype),
                    preferred_element_type=jnp.float32)              # (C, tq)
    o_ref[...] = out_u * (gamma_ref[0] / l) + x_q


def self_attn_forward(x_nchw, params, *, mxu_dtype=jnp.bfloat16, tq=None):
    """Forward pass of self_attn.

    x_nchw: (B, C, H, W) float32.
    mxu_dtype: operand dtype fed to the MXU (bf16 fast path on v5e/v6e/v7x,
      f32 for near-bit-accurate checking).  Accumulation / softmax stay f32.
    tq: query-tile width (multiple of 128).  Defaults to min(256, round_up(N, 128)).
    """
    B, C, H, W = x_nchw.shape
    N = H * W
    Cq = params["wq"].shape[0]
    cq_pad = _round_up(max(Cq, 1), 8)

    if tq is None:
        tq = min(256, _round_up(N, 128))
    assert tq % 128 == 0, "query tile must be a multiple of 128 lanes"
    n_pad = _round_up(N, tq)

    # Zero-pad the query/key output channels to a sublane-tile multiple so the
    # K / V slices of the fused K|V projection are tile-aligned ref views.
    def pad_rows(w, b, rows):
        w = jnp.pad(w, ((0, rows - w.shape[0]), (0, 0)))
        b = jnp.pad(b, ((0, rows - b.shape[0]),))
        return w, b

    wq, bq = pad_rows(params["wq"], params["bq"], cq_pad)
    wk, bk = pad_rows(params["wk"], params["bk"], cq_pad)

    w_kv = jnp.concatenate([wk, params["wv"]], axis=0).astype(mxu_dtype)   # (cq_pad+C, C)
    b_kv = jnp.concatenate([bk, params["bv"]], axis=0)[:, None].astype(jnp.float32)
    wq = wq.astype(mxu_dtype)                                              # (cq_pad, C)
    bq = bq[:, None].astype(jnp.float32)                                   # (cq_pad, 1)

    # NCHW -> (B, C, N) is a pure reshape; pad N to a lane-dense multiple of tq.
    x_cn = x_nchw.reshape(B, C, N)
    if n_pad > N:
        x_cn = jnp.pad(x_cn, ((0, 0), (0, 0), (0, n_pad - N)))

    kernel = functools.partial(_self_attn_kernel, cq_pad=cq_pad, n_valid=N)

    # Scoped-VMEM limit: 3/4 of the chip's physical VMEM (128 MiB v5e/v6e,
    # 64 MiB per TC on v7x).  Falls back to the compiler default if the query
    # is unavailable.
    vmem_limit = None
    try:
        cap = getattr(pltpu.get_tpu_info(), "vmem_capacity_bytes", None)
        if cap:
            vmem_limit = int(cap) * 3 // 4
    except Exception:
        pass

    out_cn = pl.pallas_call(
        kernel,
        out_shape=jax.ShapeDtypeStruct((B, C, n_pad), jnp.float32),
        grid_spec=pltpu.PrefetchScalarGridSpec(
            num_scalar_prefetch=0,
            grid=(B, n_pad // tq),
            in_specs=[
                pl.BlockSpec((None, C, n_pad), lambda bi, qi: (bi, 0, 0)),   # x (full)
                pl.BlockSpec((None, C, tq), lambda bi, qi: (bi, 0, qi)),     # x (q tile)
                pl.BlockSpec((cq_pad, C), lambda bi, qi: (0, 0)),            # W_q
                pl.BlockSpec((cq_pad, 1), lambda bi, qi: (0, 0)),            # b_q
                pl.BlockSpec((cq_pad + C, C), lambda bi, qi: (0, 0)),        # W_k|v
                pl.BlockSpec((cq_pad + C, 1), lambda bi, qi: (0, 0)),        # b_k|v
                pl.BlockSpec(memory_space=pltpu.MemorySpace.SMEM),           # gamma
            ],
            out_specs=pl.BlockSpec((None, C, tq), lambda bi, qi: (bi, 0, qi)),
            scratch_shapes=[
                pltpu.VMEM((n_pad, cq_pad), mxu_dtype),   # K^T cache (per batch elem)
                pltpu.VMEM((C, n_pad), mxu_dtype),        # V  cache (per batch elem)
            ],
        ),
        compiler_params=pltpu.CompilerParams(
            dimension_semantics=("parallel", "arbitrary"),
            vmem_limit_bytes=vmem_limit),
    )(x_cn, x_cn, wq, bq, w_kv, b_kv, params["gamma"])

    return out_cn[:, :, :N].reshape(B, C, H, W)


def init_params(key, in_channels):
    """Deterministic init matching the PyTorch module's parameter shapes.

    conv_query/key: Conv2d(C, C//8, k=1) -> weight (C//8, C), bias (C//8,)
    conv_value:     Conv2d(C, C,    k=1) -> weight (C,    C), bias (C,)
    gamma:          scalar parameter.
    """
    C = in_channels
    Cq = C // 8
    k1, k2, k3, k4, k5, k6 = jax.random.split(key, 6)
    s = 1.0 / (C ** 0.5)
    return {
        "wq": jax.random.uniform(k1, (Cq, C), jnp.float32, -s, s),
        "bq": jax.random.uniform(k2, (Cq,), jnp.float32, -s, s),
        "wk": jax.random.uniform(k3, (Cq, C), jnp.float32, -s, s),
        "bk": jax.random.uniform(k4, (Cq,), jnp.float32, -s, s),
        "wv": jax.random.uniform(k5, (C, C), jnp.float32, -s, s),
        "bv": jax.random.uniform(k6, (C,), jnp.float32, -s, s),
        # PyTorch inits gamma to 0 (out == x); use a nonzero value so the
        # attention path is actually exercised by the correctness check.
        "gamma": jnp.full((1,), 0.5, jnp.float32),
    }


def self_attn_reference(x_nchw, params):
    """Pure-JAX reference mirroring the PyTorch forward exactly (f32)."""
    B, C, H, W = x_nchw.shape
    N = H * W
    xf = x_nchw.reshape(B, C, N)                                        # (B, C, N)
    q = jnp.einsum("oc,bcn->bon", params["wq"], xf) + params["bq"][None, :, None]
    k = jnp.einsum("oc,bcn->bon", params["wk"], xf) + params["bk"][None, :, None]
    v = jnp.einsum("oc,bcn->bon", params["wv"], xf) + params["bv"][None, :, None]
    energy = jnp.einsum("bdi,bdj->bij", q, k)                           # (B, N, N)
    attn = jax.nn.softmax(energy, axis=-1)
    out = jnp.einsum("bcj,bij->bci", v, attn)                           # (B, C, N)
    out = out.reshape(B, C, H, W)
    return params["gamma"][0] * out + x_nchw


if __name__ == "__main__":
    key = jax.random.PRNGKey(0)
    kx, kp = jax.random.split(key)

    # in_channels=32 -> query/key channels Cq=4 (padded to 8); H=W=16 -> N=256.
    B, C, H, W = 2, 32, 16, 16
    x = jax.random.normal(kx, (B, C, H, W), jnp.float32)
    params = init_params(kp, C)

    ref = jax.block_until_ready(self_attn_reference(x, params))

    # f32 MXU path with tq=128: two query tiles -> exercises K/V scratch reuse.
    out_f32 = jax.block_until_ready(
        self_attn_forward(x, params, mxu_dtype=jnp.float32, tq=128))
    assert out_f32.shape == (B, C, H, W)
    assert jnp.allclose(out_f32, ref, atol=5e-3, rtol=5e-3), "f32 path mismatch"

    # bf16 MXU operand path (default), single 256-wide query tile.
    out_bf16 = jax.block_until_ready(self_attn_forward(x, params))
    assert jnp.allclose(out_bf16, ref, atol=5e-2, rtol=5e-2), "bf16 path mismatch"

    # Non-128-multiple spatial size -> exercises lane padding + key masking.
    H2 = W2 = 10                               # N = 100, padded to 128
    x2 = jax.random.normal(jax.random.PRNGKey(1), (1, C, H2, W2), jnp.float32)
    ref2 = jax.block_until_ready(self_attn_reference(x2, params))
    out2 = jax.block_until_ready(
        self_attn_forward(x2, params, mxu_dtype=jnp.float32))
    assert out2.shape == (1, C, H2, W2)
    assert jnp.allclose(out2, ref2, atol=5e-3, rtol=5e-3), "padded path mismatch"

    print("KERNEL_OK")
</pallas_src>

<mosaic_0001>
module attributes {stable_mosaic.version = 11 : i64} {
  func.func @_self_attn_kernel(%arg0: i32, %arg1: i32, %arg2: memref<1x32x256xf32, #tpu.memory_space<vmem>>, %arg3: memref<1x32x128xf32, #tpu.memory_space<vmem>>, %arg4: memref<8x32xf32, #tpu.memory_space<vmem>>, %arg5: memref<8x1xf32, #tpu.memory_space<vmem>>, %arg6: memref<40x32xf32, #tpu.memory_space<vmem>>, %arg7: memref<40x1xf32, #tpu.memory_space<vmem>>, %arg8: memref<1xf32, #tpu.memory_space<smem>>, %arg9: memref<1x32x128xf32, #tpu.memory_space<vmem>>, %arg10: memref<256x8xf32, #tpu.memory_space<vmem>>, %arg11: memref<32x256xf32, #tpu.memory_space<vmem>>) attributes {dimension_semantics = [#tpu.dimension_semantics<parallel>, #tpu.dimension_semantics<arbitrary>], iteration_bounds = array<i64: 2, 2>, scalar_prefetch = 0 : i64, scratch_operands = 2 : i64, tpu.core_type = #tpu.core_type<tc>, window_params = [{transform_indices = @transform_0, window_bounds = array<i64: 1, 32, 256>}, {transform_indices = @transform_1, window_bounds = array<i64: 1, 32, 128>}, {pipeline_mode = #tpu.pipeline_mode<synchronous>, transform_indices = @transform_2, window_bounds = array<i64: 8, 32>}, {pipeline_mode = #tpu.pipeline_mode<synchronous>, transform_indices = @transform_3, window_bounds = array<i64: 8, 1>}, {pipeline_mode = #tpu.pipeline_mode<synchronous>, transform_indices = @transform_4, window_bounds = array<i64: 40, 32>}, {pipeline_mode = #tpu.pipeline_mode<synchronous>, transform_indices = @transform_5, window_bounds = array<i64: 40, 1>}, {transform_indices = @transform_6, window_bounds = array<i64: 1>}, {transform_indices = @transform_7, window_bounds = array<i64: 1, 32, 128>}]} {
    %c0_i32 = arith.constant 0 : i32
    %0 = arith.cmpi eq, %arg1, %c0_i32 : i32
    %1 = arith.extui %0 : i1 to i32
    %c0_i32_0 = arith.constant 0 : i32
    %2 = arith.cmpi ne, %1, %c0_i32_0 : i32
    scf.if %2 {
      %c0_19 = arith.constant 0 : index
      %c0_20 = arith.constant 0 : index
      %c0_21 = arith.constant 0 : index
      %30 = vector.load %arg2[%c0_19, %c0_20, %c0_21] : memref<1x32x256xf32, #tpu.memory_space<vmem>>, vector<1x32x256xf32>
      %31 = vector.shape_cast %30 : vector<1x32x256xf32> to vector<32x256xf32>
      %c0_22 = arith.constant 0 : index
      %c0_23 = arith.constant 0 : index
      %32 = vector.load %arg6[%c0_22, %c0_23] : memref<40x32xf32, #tpu.memory_space<vmem>>, vector<40x32xf32>
      %cst_24 = arith.constant dense<0.000000e+00> : vector<40x256xf32>
      %33 = tpu.matmul %32, %31, %cst_24 {dimension_numbers = #tpu.dot_dimension_numbers<[1], [0], [0], [1], [0, 0, 1, 1], [], []>} : vector<40x32xf32>, vector<32x256xf32>, vector<40x256xf32> -> vector<40x256xf32>
      %c0_25 = arith.constant 0 : index
      %c0_26 = arith.constant 0 : index
      %34 = vector.load %arg7[%c0_25, %c0_26] : memref<40x1xf32, #tpu.memory_space<vmem>>, vector<40x1xf32>
      %35 = vector.broadcast %34 : vector<40x1xf32> to vector<40x256xf32>
      %36 = arith.addf %33, %35 : vector<40x256xf32>
      %37 = vector.extract_strided_slice %36 {offsets = [0, 0], sizes = [8, 256], strides = [1, 1]} : vector<40x256xf32> to vector<8x256xf32>
      %38 = tpu.transpose %37, [1, 0] : vector<8x256xf32> -> vector<256x8xf32>
      %c0_27 = arith.constant 0 : index
      %c0_28 = arith.constant 0 : index
      %39 = vector.load %arg10[%c0_27, %c0_28] : memref<256x8xf32, #tpu.memory_space<vmem>>, vector<256x8xf32>
      tpu.vector_store %arg10[%c0_27, %c0_28], %38 {strides = array<i32>} : memref<256x8xf32, #tpu.memory_space<vmem>>, vector<256x8xf32>,
      %40 = vector.extract_strided_slice %36 {offsets = [8, 0], sizes = [32, 256], strides = [1, 1]} : vector<40x256xf32> to vector<32x256xf32>
      %c0_29 = arith.constant 0 : index
      %c0_30 = arith.constant 0 : index
      %41 = vector.load %arg11[%c0_29, %c0_30] : memref<32x256xf32, #tpu.memory_space<vmem>>, vector<32x256xf32>
      tpu.vector_store %arg11[%c0_29, %c0_30], %40 {strides = array<i32>} : memref<32x256xf32, #tpu.memory_space<vmem>>, vector<32x256xf32>,
    } else {
    }
    %c0 = arith.constant 0 : index
    %c0_1 = arith.constant 0 : index
    %c0_2 = arith.constant 0 : index
    %3 = vector.load %arg3[%c0, %c0_1, %c0_2] : memref<1x32x128xf32, #tpu.memory_space<vmem>>, vector<1x32x128xf32>
    %4 = vector.shape_cast %3 : vector<1x32x128xf32> to vector<32x128xf32>
    %c0_3 = arith.constant 0 : index
    %c0_4 = arith.constant 0 : index
    %5 = vector.load %arg4[%c0_3, %c0_4] : memref<8x32xf32, #tpu.memory_space<vmem>>, vector<8x32xf32>
    %cst = arith.constant dense<0.000000e+00> : vector<8x128xf32>
    %6 = tpu.matmul %5, %4, %cst {dimension_numbers = #tpu.dot_dimension_numbers<[1], [0], [0], [1], [0, 0, 1, 1], [], []>} : vector<8x32xf32>, vector<32x128xf32>, vector<8x128xf32> -> vector<8x128xf32>
    %c0_5 = arith.constant 0 : index
    %c0_6 = arith.constant 0 : index
    %7 = vector.load %arg5[%c0_5, %c0_6] : memref<8x1xf32, #tpu.memory_space<vmem>>, vector<8x1xf32>
    %8 = vector.broadcast %7 : vector<8x1xf32> to vector<8x128xf32>
    %9 = arith.addf %6, %8 : vector<8x128xf32>
    %c0_7 = arith.constant 0 : index
    %c0_8 = arith.constant 0 : index
    %10 = vector.load %arg10[%c0_7, %c0_8] : memref<256x8xf32, #tpu.memory_space<vmem>>, vector<256x8xf32>
    %cst_9 = arith.constant dense<0.000000e+00> : vector<256x128xf32>
    %11 = tpu.matmul %10, %9, %cst_9 {dimension_numbers = #tpu.dot_dimension_numbers<[1], [0], [0], [1], [0, 0, 1, 1], [], []>} : vector<256x8xf32>, vector<8x128xf32>, vector<256x128xf32> -> vector<256x128xf32>
    %cst_10 = arith.constant dense<0xFF800000> : vector<128xf32>
    %12 = vector.multi_reduction <maximumf>, %11, %cst_10 [0] : vector<256x128xf32> to vector<128xf32>
    %13 = vector.shape_cast %12 : vector<128xf32> to vector<1x128xf32>
    %14 = vector.broadcast %13 : vector<1x128xf32> to vector<256x128xf32>
    %15 = arith.subf %11, %14 : vector<256x128xf32>
    %16 = math.exp %15 : vector<256x128xf32>
    %cst_11 = arith.constant dense<0.000000e+00> : vector<128xf32>
    %17 = vector.multi_reduction <add>, %16, %cst_11 [0] : vector<256x128xf32> to vector<128xf32>
    %18 = vector.shape_cast %17 : vector<128xf32> to vector<1x128xf32>
    %c0_12 = arith.constant 0 : index
    %c0_13 = arith.constant 0 : index
    %19 = vector.load %arg11[%c0_12, %c0_13] : memref<32x256xf32, #tpu.memory_space<vmem>>, vector<32x256xf32>
    %cst_14 = arith.constant dense<0.000000e+00> : vector<32x128xf32>
    %20 = tpu.matmul %19, %16, %cst_14 {dimension_numbers = #tpu.dot_dimension_numbers<[1], [0], [0], [1], [0, 0, 1, 1], [], []>} : vector<32x256xf32>, vector<256x128xf32>, vector<32x128xf32> -> vector<32x128xf32>
    %c0_15 = arith.constant 0 : index
    %21 = memref.load %arg8[%c0_15] : memref<1xf32, #tpu.memory_space<smem>>
    %22 = vector.broadcast %21 : f32 to vector<1x128xf32>
    %23 = arith.divf %22, %18 : vector<1x128xf32>
    %24 = vector.broadcast %23 : vector<1x128xf32> to vector<32x128xf32>
    %25 = arith.mulf %20, %24 : vector<32x128xf32>
    %26 = arith.addf %25, %4 : vector<32x128xf32>
    %c0_16 = arith.constant 0 : index
    %c0_17 = arith.constant 0 : index
    %c0_18 = arith.constant 0 : index
    %27 = vector.load %arg9[%c0_16, %c0_17, %c0_18] : memref<1x32x128xf32, #tpu.memory_space<vmem>>, vector<1x32x128xf32>
    %28 = vector.shape_cast %27 : vector<1x32x128xf32> to vector<32x128xf32>
    %29 = vector.shape_cast %26 : vector<32x128xf32> to vector<1x32x128xf32>
    tpu.vector_store %arg9[%c0_16, %c0_17, %c0_18], %29 {strides = array<i32>} : memref<1x32x128xf32, #tpu.memory_space<vmem>>, vector<1x32x128xf32>,
    return
  }
  func.func @transform_0(%arg0: i32, %arg1: i32) -> (i32, i32, i32) {
    %c0_i32 = arith.constant 0 : i32
    %c0_i32_0 = arith.constant 0 : i32
    %c0_i32_1 = arith.constant 0 : i32
    return %arg0, %c0_i32, %c0_i32_0 : i32, i32, i32
  }
  func.func @transform_1(%arg0: i32, %arg1: i32) -> (i32, i32, i32) {
    %c0_i32 = arith.constant 0 : i32
    %c0_i32_0 = arith.constant 0 : i32
    return %arg0, %c0_i32, %arg1 : i32, i32, i32
  }
  func.func @transform_2(%arg0: i32, %arg1: i32) -> (i32, i32) {
    %c0_i32 = arith.constant 0 : i32
    %c0_i32_0 = arith.constant 0 : i32
    %c0_i32_1 = arith.constant 0 : i32
    return %c0_i32, %c0_i32_0 : i32, i32
  }
  func.func @transform_3(%arg0: i32, %arg1: i32) -> (i32, i32) {
    %c0_i32 = arith.constant 0 : i32
    %c0_i32_0 = arith.constant 0 : i32
    %c0_i32_1 = arith.constant 0 : i32
    return %c0_i32, %c0_i32_0 : i32, i32
  }
  func.func @transform_4(%arg0: i32, %arg1: i32) -> (i32, i32) {
    %c0_i32 = arith.constant 0 : i32
    %c0_i32_0 = arith.constant 0 : i32
    %c0_i32_1 = arith.constant 0 : i32
    return %c0_i32, %c0_i32_0 : i32, i32
  }
  func.func @transform_5(%arg0: i32, %arg1: i32) -> (i32, i32) {
    %c0_i32 = arith.constant 0 : i32
    %c0_i32_0 = arith.constant 0 : i32
    %c0_i32_1 = arith.constant 0 : i32
    return %c0_i32, %c0_i32_0 : i32, i32
  }
  func.func @transform_6(%arg0: i32, %arg1: i32) -> i32 {
    %c0_i32 = arith.constant 0 : i32
    %c0_i32_0 = arith.constant 0 : i32
    return %c0_i32 : i32
  }
  func.func @transform_7(%arg0: i32, %arg1: i32) -> (i32, i32, i32) {
    %c0_i32 = arith.constant 0 : i32
    %c0_i32_0 = arith.constant 0 : i32
    return %arg0, %c0_i32, %arg1 : i32, i32, i32
  }
}

</mosaic_0001>

<llo_original>
// kernel: tpu_custom_call.1
$region0: #{tpu_custom_call.1}
  #allocation0 [shape = 'u32[]', space=smem, size = 0x4, offset = 0x4, fixed_abs, tag = 'smem constant byte address 0x4 - core index']
  #allocation1 [shape = 'u32[144,128]{1,0:T(1,128)}', space=vmem, size = 0x12000, scoped, tag = 'internal scratch']
  #allocation2 [shape = 'f32[256,8]{1,0:T(8,128)}', space=vmem, size = 0x20000, scoped, tag = 'scratch operand']
  #allocation3 [shape = 'f32[32,256]{1,0:T(8,128)}', space=vmem, size = 0x8000, scoped, tag = 'scratch operand']
  #allocation4 [shape = 'f32[1]{0:T(128)S(6)}', space=smem, size = 0x200, scoped, tag = 'scoped memory for tpu_custom_call.1']
  %s0 = inlined_call_operand.hbm [shape: f32[2,32,256], index: 0, kind: input, shape index: {}]
  %s1 = inlined_call_operand.vmem [shape: f32[2,32,256], index: 1, kind: input, shape index: {}]
  %s2 = inlined_call_operand.hbm [shape: f32[8,32], index: 2, kind: input, shape index: {}]
  %s3 = inlined_call_operand.vmem [shape: f32[8,1], index: 3, kind: input, shape index: {}]
  %s4 = inlined_call_operand.vmem [shape: f32[40,32], index: 4, kind: input, shape index: {}]
  %s5 = inlined_call_operand.vmem [shape: f32[40,1], index: 5, kind: input, shape index: {}]
  %s6 = inlined_call_operand.<no memory space> [shape: f32[1], index: 6, kind: input, shape index: {}]
  %s7 = inlined_call_operand.hbm [shape: f32[2,32,256], index: 7, kind: output, shape index: {}]
  %s8 = sld [smem:[#allocation0]]
  $region111: #{tpu_custom_call.1} parent=0
    _
  %s10 = ssub.s32 1, %s8
  %s11 = scalar_select 0, %s10, %s8
  %12 = sst [smem:[#allocation4]] %s6
  $region1: #{tpu_custom_call.1} parent=0
    #allocation5 [shape = 'u8[65536]{0}', space=vmem, size = 0x10000, scoped, tag = 'input window, operand 0']
    #allocation6 [shape = 's32[2]{0}', space=sflag, size = 0x8, scoped, tag = 'scoped memory for tpu_custom_call.1']
    #allocation7 [shape = 's32[2]{0}', space=sflag, size = 0x8, scoped, tag = 'scoped memory for tpu_custom_call.1']
    #allocation8 [shape = 'u8[32768]{0}', space=vmem, size = 0x8000, scoped, tag = 'input window, operand 1']
    #allocation9 [shape = 'u8[4096]{0}', space=vmem, size = 0x1000, scoped, tag = 'input window, operand 2, single buffered']
    #allocation10 [shape = 's32[1]{0}', space=sflag, size = 0x4, scoped, tag = 'scoped memory for tpu_custom_call.1']
    #allocation11 [shape = 'u8[32768]{0}', space=vmem, size = 0x8000, scoped, tag = 'output window, operand 0']
    %13 = vsyncpa [#allocation6], 0
    %s14 = scalar_lea.sflag [#allocation6], 1
    %15 = vsyncpa %s14, 0
    %16 = vsyncpa [#allocation10], 0
    %17 = vsyncpa [#allocation7], 0
    %s18 = scalar_lea.sflag [#allocation7], 1
    %19 = vsyncpa %s18, 0
    loop: start=0, step=1, limit=6
    $region2: #{tpu_custom_call.1} parent=1 // loop_pre_header
      _
    $region3: #{tpu_custom_call.1} parent=1 // loop_header
      %s21 = sphi 0, %s25
      %p22 = scmp.ge.s32.totalorder %s21, 6
      %s28 = sphi 0, %s40
      %s29 = sphi 0, %s36
      %s30 = sphi 0, %s28
      %s31 = sphi 0, %s29
      %s32 = sphi 0, %s30
      %s33 = sphi 0, %s31
      %s43 = sphi 0, %s45
      %s46 = sphi 0, %s43
      %s47 = sphi 0, %s46
      %s63 = sphi 0, %s47
      %s71 = sphi 0, %s73
      %s74 = sphi 0, %s71
      %s75 = sphi 0, %s74
      %s91 = sphi 0, %s75
      %s95 = sphi 0, %s95
      %s97 = sphi 0, %s95
      %s98 = sphi 0, %s97
      %s112 = sphi 0, %s98
      %s116 = sphi 0, %s116
      %s118 = sphi 0, %s116
      %s119 = sphi 0, %s118
      %s133 = sphi 0, %s119
      %s137 = sphi 0, %s137
      %s139 = sphi 0, %s137
      %s140 = sphi 0, %s139
      %s154 = sphi 0, %s140
      %s158 = sphi 0, %s158
      %s160 = sphi 0, %s158
      %s161 = sphi 0, %s160
      %s175 = sphi 0, %s161
      %s179 = sphi 0, %s179
      %s181 = sphi 0, %s179
      %s182 = sphi 0, %s181
      %s196 = sphi 0, %s182
      %s204 = sphi 0, %s206
      %s207 = sphi 0, %s204
      %s208 = sphi 0, %s207
      %s224 = sphi 0, %s208
    $region4: #{tpu_custom_call.1} parent=1 // loop_header_branch
      %24 = sbr.rel (%p22) target = $region8
    $region5: #{tpu_custom_call.1} parent=1 // loop_body
      %s26 = ssub.s32 %s21, 1
      %s27 = ssub.s32 %s21, 2
      %s34 = sadd.s32 1, %s29
      %p35 = scmp.ge.s32.totalorder %s34, 2
      %s36 = scalar_select %p35, 0, %s34
      %s37 = sadd.s32 1, %s28
      %s38 = scalar_select %p35, %s37, %s28
      %p39 = scmp.ge.s32.totalorder %s38, 2
      %s40 = scalar_select %p39, 0, %s38
      %s41 = ssub.s32 %s28, %s40
      %p42 = scmp.eq.s32.totalorder %s41, 0
      %s44 = sadd.s32 %s43, 1
      %s45 = scalar_select %p42, %s43, %s44
      %p48 = pneg %p42
      %p49 = scmp.eq.s32.totalorder %s21, 3
      %p50 = por %p48, %p49
      %p51 = scmp.ne.s32.totalorder %s43, %s46
      %p52 = scmp.eq.s32.totalorder %s21, 0
      %p53 = por %p51, %p52
      %p54 = scmp.ne.s32.totalorder %s43, %s46
      %p55 = scmp.eq.s32.totalorder %s26, 3
      %p56 = por %p54, %p55
      %p57 = scmp.ne.s32.totalorder %s46, %s47
      %p58 = scmp.eq.s32.totalorder %s26, 0
      %p59 = por %p57, %p58
      %p60 = scmp.ne.s32.totalorder %s46, %s47
      %p61 = scmp.eq.s32.totalorder %s27, 3
      %p62 = por %p60, %p61
      %p64 = scmp.ne.s32.totalorder %s47, %s63
      %p65 = scmp.eq.s32.totalorder %s27, 0
      %p66 = por %p64, %p65
      %s67 = ssub.s32 %s28, %s40
      %s68 = ssub.s32 %s29, %s36
      %s69 = sor.u32 %s67, %s68
      %p70 = scmp.eq.s32.totalorder %s69, 0
      %s72 = sadd.s32 %s71, 1
      %s73 = scalar_select %p70, %s71, %s72
      %p76 = pneg %p70
      %p77 = scmp.eq.s32.totalorder %s21, 3
      %p78 = por %p76, %p77
      %p79 = scmp.ne.s32.totalorder %s71, %s74
      %p80 = scmp.eq.s32.totalorder %s21, 0
      %p81 = por %p79, %p80
      %p82 = scmp.ne.s32.totalorder %s71, %s74
      %p83 = scmp.eq.s32.totalorder %s26, 3
      %p84 = por %p82, %p83
      %p85 = scmp.ne.s32.totalorder %s74, %s75
      %p86 = scmp.eq.s32.totalorder %s26, 0
      %p87 = por %p85, %p86
      %p88 = scmp.ne.s32.totalorder %s74, %s75
      %p89 = scmp.eq.s32.totalorder %s27, 3
      %p90 = por %p88, %p89
      %p92 = scmp.ne.s32.totalorder %s75, %s91
      %p93 = scmp.eq.s32.totalorder %s27, 0
      %p94 = por %p92, %p93
      %s96 = sadd.s32 %s95, 1
      %p99 = scmp.eq.s32.totalorder %s21, 3
      %p100 = scmp.ne.s32.totalorder %s95, %s97
      %p101 = scmp.eq.s32.totalorder %s21, 0
      %p102 = por %p100, %p101
      %p103 = scmp.ne.s32.totalorder %s95, %s97
      %p104 = scmp.eq.s32.totalorder %s26, 3
      %p105 = por %p103, %p104
      %p106 = scmp.ne.s32.totalorder %s97, %s98
      %p107 = scmp.eq.s32.totalorder %s26, 0
      %p108 = por %p106, %p107
      %p109 = scmp.ne.s32.totalorder %s97, %s98
      %p110 = scmp.eq.s32.totalorder %s27, 3
      %p111 = por %p109, %p110
      %p113 = scmp.ne.s32.totalorder %s98, %s112
      %p114 = scmp.eq.s32.totalorder %s27, 0
      %p115 = por %p113, %p114
      %s117 = sadd.s32 %s116, 1
      %p120 = scmp.eq.s32.totalorder %s21, 3
      %p121 = scmp.ne.s32.totalorder %s116, %s118
      %p122 = scmp.eq.s32.totalorder %s21, 0
      %p123 = por %p121, %p122
      %p124 = scmp.ne.s32.totalorder %s116, %s118
      %p125 = scmp.eq.s32.totalorder %s26, 3
      %p126 = por %p124, %p125
      %p127 = scmp.ne.s32.totalorder %s118, %s119
      %p128 = scmp.eq.s32.totalorder %s26, 0
      %p129 = por %p127, %p128
      %p130 = scmp.ne.s32.totalorder %s118, %s119
      %p131 = scmp.eq.s32.totalorder %s27, 3
      %p132 = por %p130, %p131
      %p134 = scmp.ne.s32.totalorder %s119, %s133
      %p135 = scmp.eq.s32.totalorder %s27, 0
      %p136 = por %p134, %p135
      %s138 = sadd.s32 %s137, 1
      %p141 = scmp.eq.s32.totalorder %s21, 3
      %p142 = scmp.ne.s32.totalorder %s137, %s139
      %p143 = scmp.eq.s32.totalorder %s21, 0
      %p144 = por %p142, %p143
      %p145 = scmp.ne.s32.totalorder %s137, %s139
      %p146 = scmp.eq.s32.totalorder %s26, 3
      %p147 = por %p145, %p146
      %p148 = scmp.ne.s32.totalorder %s139, %s140
      %p149 = scmp.eq.s32.totalorder %s26, 0
      %p150 = por %p148, %p149
      %p151 = scmp.ne.s32.totalorder %s139, %s140
      %p152 = scmp.eq.s32.totalorder %s27, 3
      %p153 = por %p151, %p152
      %p155 = scmp.ne.s32.totalorder %s140, %s154
      %p156 = scmp.eq.s32.totalorder %s27, 0
      %p157 = por %p155, %p156
      %s159 = sadd.s32 %s158, 1
      %p162 = scmp.eq.s32.totalorder %s21, 3
      %p163 = scmp.ne.s32.totalorder %s158, %s160
      %p164 = scmp.eq.s32.totalorder %s21, 0
      %p165 = por %p163, %p164
      %p166 = scmp.ne.s32.totalorder %s158, %s160
      %p167 = scmp.eq.s32.totalorder %s26, 3
      %p168 = por %p166, %p167
      %p169 = scmp.ne.s32.totalorder %s160, %s161
      %p170 = scmp.eq.s32.totalorder %s26, 0
      %p171 = por %p169, %p170
      %p172 = scmp.ne.s32.totalorder %s160, %s161
      %p173 = scmp.eq.s32.totalorder %s27, 3
      %p174 = por %p172, %p173
      %p176 = scmp.ne.s32.totalorder %s161, %s175
      %p177 = scmp.eq.s32.totalorder %s27, 0
      %p178 = por %p176, %p177
      %s180 = sadd.s32 %s179, 1
      %p183 = scmp.eq.s32.totalorder %s21, 3
      %p184 = scmp.ne.s32.totalorder %s179, %s181
      %p185 = scmp.eq.s32.totalorder %s21, 0
      %p186 = por %p184, %p185
      %p187 = scmp.ne.s32.totalorder %s179, %s181
      %p188 = scmp.eq.s32.totalorder %s26, 3
      %p189 = por %p187, %p188
      %p190 = scmp.ne.s32.totalorder %s181, %s182
      %p191 = scmp.eq.s32.totalorder %s26, 0
      %p192 = por %p190, %p191
      %p193 = scmp.ne.s32.totalorder %s181, %s182
      %p194 = scmp.eq.s32.totalorder %s27, 3
      %p195 = por %p193, %p194
      %p197 = scmp.ne.s32.totalorder %s182, %s196
      %p198 = scmp.eq.s32.totalorder %s27, 0
      %p199 = por %p197, %p198
      %s200 = ssub.s32 %s28, %s40
      %s201 = ssub.s32 %s29, %s36
      %s202 = sor.u32 %s200, %s201
      %p203 = scmp.eq.s32.totalorder %s202, 0
      %s205 = sadd.s32 %s204, 1
      %s206 = scalar_select %p203, %s204, %s205
      %p209 = pneg %p203
      %p210 = scmp.eq.s32.totalorder %s21, 3
      %p211 = por %p209, %p210
      %p212 = scmp.ne.s32.totalorder %s204, %s207
      %p213 = scmp.eq.s32.totalorder %s21, 0
      %p214 = por %p212, %p213
      %p215 = scmp.ne.s32.totalorder %s204, %s207
      %p216 = scmp.eq.s32.totalorder %s26, 3
      %p217 = por %p215, %p216
      %p218 = scmp.ne.s32.totalorder %s207, %s208
      %p219 = scmp.eq.s32.totalorder %s26, 0
      %p220 = por %p218, %p219
      %p221 = scmp.ne.s32.totalorder %s207, %s208
      %p222 = scmp.eq.s32.totalorder %s27, 3
      %p223 = por %p221, %p222
      %p225 = scmp.ne.s32.totalorder %s208, %s224
      %p226 = scmp.eq.s32.totalorder %s27, 0
      %p227 = por %p225, %p226
      %p228 = scmp.le.s32.totalorder 1, %s21
      %p229 = scmp.lt.s32.totalorder %s21, 5
      %p230 = pnand %p228, %p229
      %p231 = pneg %p230
      // Predicated region
      $region9: #{tpu_custom_call.1} parent=5 // pred_check
        _
      $region10: #{tpu_custom_call.1} parent=5 // pred_check_branch
        %233 = sbr.rel (%p230) target = $region12
      $region11: #{tpu_custom_call.1} parent=5 // pred_region
        %s234 = ssub.s32 %s21, 1
        // Predicated region
        $region13: #{tpu_custom_call.1} parent=11 // pred_check
          %p235 = pneg %p108
        $region14: #{tpu_custom_call.1} parent=11 // pred_check_branch
          %237 = sbr.rel (%p235) target = $region16
        $region15: #{tpu_custom_call.1} parent=11 // pred_region
          %s239 = ssub.s32 128, 128
          %240 = vsyncadd [#allocation10], %s239
          %s242 = sshll.u32 [#allocation9], 4
          %s243 = int_to_ptr.vmem [resolvable:$true] %s242
          %245 = dma.hbm_to_vmem [thread:$0]  %s2, 128, %s243, [#allocation10]
        $region16: #{tpu_custom_call.1} parent=11 // pred_fallthru
          _
        // Predicated region
        $region17: #{tpu_custom_call.1} parent=11 // pred_check
          %p246 = pneg %p129
        $region18: #{tpu_custom_call.1} parent=11 // pred_check_branch
          %248 = sbr.rel (%p246) target = $region20
        $region19: #{tpu_custom_call.1} parent=11 // pred_region
          _
        $region20: #{tpu_custom_call.1} parent=11 // pred_fallthru
          _
        // Predicated region
        $region21: #{tpu_custom_call.1} parent=11 // pred_check
          %p249 = pneg %p150
        $region22: #{tpu_custom_call.1} parent=11 // pred_check_branch
          %251 = sbr.rel (%p249) target = $region24
        $region23: #{tpu_custom_call.1} parent=11 // pred_region
          _
        $region24: #{tpu_custom_call.1} parent=11 // pred_fallthru
          _
        // Predicated region
        $region25: #{tpu_custom_call.1} parent=11 // pred_check
          %p252 = pneg %p171
        $region26: #{tpu_custom_call.1} parent=11 // pred_check_branch
          %254 = sbr.rel (%p252) target = $region28
        $region27: #{tpu_custom_call.1} parent=11 // pred_region
          _
        $region28: #{tpu_custom_call.1} parent=11 // pred_fallthru
          _
        // Predicated region
        $region29: #{tpu_custom_call.1} parent=11 // pred_check
          %p255 = pneg %p192
        $region30: #{tpu_custom_call.1} parent=11 // pred_check_branch
          %257 = sbr.rel (%p255) target = $region32
        $region31: #{tpu_custom_call.1} parent=11 // pred_region
          _
        $region32: #{tpu_custom_call.1} parent=11 // pred_fallthru
          _
      $region12: #{tpu_custom_call.1} parent=5 // pred_fallthru
        _
      %p258 = scmp.lt.s32.totalorder %s21, 4
      // Predicated region
      $region33: #{tpu_custom_call.1} parent=5 // pred_check
        %p259 = pneg %p258
      $region34: #{tpu_custom_call.1} parent=5 // pred_check_branch
        %261 = sbr.rel (%p259) target = $region36
      $region35: #{tpu_custom_call.1} parent=5 // pred_region
        // Predicated region
        $region37: #{tpu_custom_call.1} parent=35 // pred_check
          %p262 = pneg %p53
        $region38: #{tpu_custom_call.1} parent=35 // pred_check_branch
          %264 = sbr.rel (%p262) target = $region40
        $region39: #{tpu_custom_call.1} parent=35 // pred_region
          %s265 = sand.u32 %s43, 1
          %s266 = scalar_lea.sflag [#allocation6], %s265
          %s267 = sand.u32 %s43, 1
          %s268 = smul.addr %s267, 64
          %s269 = scalar_lea.vmem [#allocation5], %s268
          %s271 = ssub.s32 1024, 1024
          %272 = vsyncadd %s266, %s271
          %s273 = smul.addr %s28, 8
          %s274 = smul.addr %s273, 128
          %s275 = scalar_lea.hbm %s0, %s274
          %s276 = sshll.u32 %s269, 4
          %s277 = int_to_ptr.vmem [resolvable:$true] %s276
          %282 = dma.hbm_to_vmem [thread:$0]  %s275, 1024, %s277, %s266, 256, 256, 16
        $region40: #{tpu_custom_call.1} parent=35 // pred_fallthru
          _
        // Predicated region
        $region41: #{tpu_custom_call.1} parent=35 // pred_check
          %p283 = pneg %p81
        $region42: #{tpu_custom_call.1} parent=35 // pred_check_branch
          %285 = sbr.rel (%p283) target = $region44
        $region43: #{tpu_custom_call.1} parent=35 // pred_region
          %s286 = sand.u32 %s71, 1
          %s287 = sand.u32 %s71, 1
          %s288 = smul.addr %s287, 32
          %s289 = scalar_lea.vmem [#allocation8], %s288
          %s290 = smul.addr %s28, 8
          %s291 = sadd.s32 %s29, %s290
          %s292 = smul.addr %s291, 8
          %s293 = scalar_lea.vmem %s1, %s292
          // Predicated region
          $region45: #{tpu_custom_call.1} parent=43 // pred_check
            _
          $region46: #{tpu_custom_call.1} parent=43 // pred_check_branch
            %295 = sbr.rel (0) target = $region48
          $region47: #{tpu_custom_call.1} parent=43 // pred_region
            // Predicated region
            $region49: #{tpu_custom_call.1} parent=47 // pred_check
              _
            $region50: #{tpu_custom_call.1} parent=47 // pred_check_branch
              %297 = sbr.rel (0) target = $region52
            $region51: #{tpu_custom_call.1} parent=47 // pred_region
              // Predicated region
              $region64: #{tpu_custom_call.1} parent=51 // pred_check
                _
              $region65: #{tpu_custom_call.1} parent=51 // pred_check_branch
                %318 = sbr.rel (0) target = $region67
              $region66: #{tpu_custom_call.1} parent=51 // pred_region
                loop: start=0, step=1, limit=1
                $region68: #{tpu_custom_call.1} parent=66 // loop_pre_header
                  _
                $region69: #{tpu_custom_call.1} parent=66 // loop_header
                  %s320 = sphi 0, %s324
                  %p321 = scmp.ge.s32.totalorder %s320, 1
                  %s325 = sphi %s293, %s293
                  %s326 = sphi %s289, %s289
                $region70: #{tpu_custom_call.1} parent=66 // loop_header_branch
                  %323 = sbr.rel (%p321) target = $region74
                $region71: #{tpu_custom_call.1} parent=66 // loop_body
                  %v327 = vld [vmem:[%s325] sm:$0xff]
                  %328 = vst [vmem:[%s326] sm:$0xff] %v327
                  %v329 = vld [vmem:[%s325 + $0x10] sm:$0xff]
                  %330 = vst [vmem:[%s326 + $0x8] sm:$0xff] %v329
                  %v331 = vld [vmem:[%s325 + $0x20] sm:$0xff]
                  %332 = vst [vmem:[%s326 + $0x10] sm:$0xff] %v331
                  %v333 = vld [vmem:[%s325 + $0x30] sm:$0xff]
                  %334 = vst [vmem:[%s326 + $0x18] sm:$0xff] %v333
                $region72: #{tpu_custom_call.1} parent=66 // loop_footer
                  %s324 = sadd.s32 1, %s320
                $region73: #{tpu_custom_call.1} parent=66 // loop_footer_branch
                  %319 = sbr.rel target = $region69
                $region74: #{tpu_custom_call.1} parent=66 // loop_exit
                  _
              $region67: #{tpu_custom_call.1} parent=51 // pred_fallthru
                _
              // Predicated region
              $region75: #{tpu_custom_call.1} parent=51 // pred_check
                _
              $region76: #{tpu_custom_call.1} parent=51 // pred_check_branch
                %336 = sbr.rel target = $region78
              $region77: #{tpu_custom_call.1} parent=51 // pred_region
                _
              $region78: #{tpu_custom_call.1} parent=51 // pred_fallthru
                _
            $region52: #{tpu_custom_call.1} parent=47 // pred_fallthru
              _
            // Predicated region
            $region53: #{tpu_custom_call.1} parent=47 // pred_check
              _
            $region54: #{tpu_custom_call.1} parent=47 // pred_check_branch
              %299 = sbr.rel target = $region56
            $region55: #{tpu_custom_call.1} parent=47 // pred_region
              loop: start=0, step=1, limit=1
              $region57: #{tpu_custom_call.1} parent=55 // loop_pre_header
                _
              $region58: #{tpu_custom_call.1} parent=55 // loop_header
                %s302 = sphi 0, %s306
                %p303 = scmp.ge.s32.totalorder %s302, 1
                %s307 = sphi %s293, %s293
                %s308 = sphi %s289, %s289
              $region59: #{tpu_custom_call.1} parent=55 // loop_header_branch
                %305 = sbr.rel (%p303) target = $region63
              $region60: #{tpu_custom_call.1} parent=55 // loop_body
                %v309 = vld [vmem:[%s307] sm:$0xff]
                %310 = vst [vmem:[%s308] sm:$0xff] %v309
                %v311 = vld [vmem:[%s307 + $0x10] sm:$0xff]
                %312 = vst [vmem:[%s308 + $0x8] sm:$0xff] %v311
                %v313 = vld [vmem:[%s307 + $0x20] sm:$0xff]
                %314 = vst [vmem:[%s308 + $0x10] sm:$0xff] %v313
                %v315 = vld [vmem:[%s307 + $0x30] sm:$0xff]
                %316 = vst [vmem:[%s308 + $0x18] sm:$0xff] %v315
              $region61: #{tpu_custom_call.1} parent=55 // loop_footer
                %s306 = sadd.s32 1, %s302
              $region62: #{tpu_custom_call.1} parent=55 // loop_footer_branch
                %301 = sbr.rel target = $region58
              $region63: #{tpu_custom_call.1} parent=55 // loop_exit
                _
            $region56: #{tpu_custom_call.1} parent=47 // pred_fallthru
              _
          $region48: #{tpu_custom_call.1} parent=43 // pred_fallthru
            _
          %337 = vnop
        $region44: #{tpu_custom_call.1} parent=35 // pred_fallthru
          _
      $region36: #{tpu_custom_call.1} parent=5 // pred_fallthru
        _
      %p338 = scmp.le.s32.totalorder 1, %s21
      %p339 = scmp.lt.s32.totalorder %s21, 5
      %p340 = pnand %p338, %p339
      %p341 = pneg %p340
      // Predicated region
      $region79: #{tpu_custom_call.1} parent=5 // pred_check
        _
      $region80: #{tpu_custom_call.1} parent=5 // pred_check_branch
        %343 = sbr.rel (%p340) target = $region82
      $region81: #{tpu_custom_call.1} parent=5 // pred_region
        %s344 = ssub.s32 %s21, 1
        %s345 = sand.u32 %s46, 1
        %s346 = scalar_lea.sflag [#allocation6], %s345
        %s347 = sand.u32 %s46, 1
        %s348 = smul.addr %s347, 64
        %s349 = scalar_lea.vmem [#allocation5], %s348
        // Predicated region
        $region83: #{tpu_custom_call.1} parent=81 // pred_check
          %p350 = pneg %p59
        $region84: #{tpu_custom_call.1} parent=81 // pred_check_branch
          %352 = sbr.rel (%p350) target = $region86
        $region85: #{tpu_custom_call.1} parent=81 // pred_region
          %353 = dma.done %s346, 1024
        $region86: #{tpu_custom_call.1} parent=81 // pred_fallthru
          _
        %s354 = sand.u32 %s74, 1
        %s355 = sand.u32 %s74, 1
        %s356 = smul.addr %s355, 32
        %s357 = scalar_lea.vmem [#allocation8], %s356
        // Predicated region
        $region87: #{tpu_custom_call.1} parent=81 // pred_check
          %p358 = pneg %p87
        $region88: #{tpu_custom_call.1} parent=81 // pred_check_branch
          %360 = sbr.rel (%p358) target = $region90
        $region89: #{tpu_custom_call.1} parent=81 // pred_region
          _
        $region90: #{tpu_custom_call.1} parent=81 // pred_fallthru
          _
        // Predicated region
        $region91: #{tpu_custom_call.1} parent=81 // pred_check
          %p361 = pneg %p108
        $region92: #{tpu_custom_call.1} parent=81 // pred_check_branch
          %363 = sbr.rel (%p361) target = $region94
        $region93: #{tpu_custom_call.1} parent=81 // pred_region
          %364 = dma.done [#allocation10], 128
        $region94: #{tpu_custom_call.1} parent=81 // pred_fallthru
          _
        %s365 = sand.u32 %s46, 1
        %s366 = scalar_lea.sflag [#allocation6], %s365
        %s367 = sand.u32 %s46, 1
        %s368 = smul.addr %s367, 64
        %s369 = scalar_lea.vmem [#allocation5], %s368
        %p370 = pneg %p59
        %p371 = pneg %p56
        %s372 = sand.u32 %s74, 1
        %s373 = sand.u32 %s74, 1
        %s374 = smul.addr %s373, 32
        %s375 = scalar_lea.vmem [#allocation8], %s374
        %p376 = pneg %p87
        %p377 = pneg %p84
        %p378 = pneg %p108
        %p379 = pneg %p105
        %p380 = pneg %p129
        %p381 = pneg %p126
        %p382 = pneg %p150
        %p383 = pneg %p147
        %p384 = pneg %p171
        %p385 = pneg %p168
        %p386 = pneg %p192
        %p387 = pneg %p189
        %p388 = pneg %p220
        %p389 = pneg %p217
        %s390 = sand.u32 %s207, 1
        %s391 = scalar_lea.sflag [#allocation7], %s390
        %s392 = sand.u32 %s207, 1
        %s393 = smul.addr %s392, 32
        %s394 = scalar_lea.vmem [#allocation11], %s393
        %p395 = scmp.eq.s32.totalorder %s31, 0
        // Predicated region
        $region95: #{tpu_custom_call.1} parent=81 // pred_check
          %p396 = pneg %p395
        $region96: #{tpu_custom_call.1} parent=81 // pred_check_branch
          %398 = sbr.rel (%p396) target = $region98
        $region97: #{tpu_custom_call.1} parent=81 // pred_region
          %v399 = vld [vmem:[%s349] sm:$0xff]
          %v400 = vld [vmem:[%s349 + $0x8] sm:$0xff]
          %v401 = vld [vmem:[%s349 + $0x10] sm:$0xff]
          %v402 = vld [vmem:[%s349 + $0x18] sm:$0xff]
          %v403 = vld [vmem:[%s349 + $0x20] sm:$0xff]
          %v404 = vld [vmem:[%s349 + $0x28] sm:$0xff]
          %v405 = vld [vmem:[%s349 + $0x30] sm:$0xff]
          %v406 = vld [vmem:[%s349 + $0x38] sm:$0xff]
          %v407 = vld [vmem:[%s4] sm:$0xff]
          %v408 = vld [vmem:[%s4 + $0x8] sm:$0xff]
          %v409 = vld [vmem:[%s4 + $0x10] sm:$0xff]
          %v410 = vld [vmem:[%s4 + $0x18] sm:$0xff]
          %v411 = vld [vmem:[%s4 + $0x20] sm:$0xff]
          %v412 = vld [vmem:[%s5] sm:$0xff]
          %v413 = vld [vmem:[%s5 + $0x8] sm:$0xff]
          %v414 = vld [vmem:[%s5 + $0x10] sm:$0xff]
          %v415 = vld [vmem:[%s5 + $0x18] sm:$0xff]
          %v416 = vld [vmem:[%s5 + $0x20] sm:$0xff]
          %418 = vset.pattern.permute.xlu0 0
          %419 = vperm.xlu0 %418, %v412
          %v420 = vpop.permute.xlu0 %419
          %423 = vset.pattern.permute.xlu0 0
          %424 = vperm.xlu0 %423, %v413
          %v425 = vpop.permute.xlu0 %424
          %428 = vset.pattern.permute.xlu0 0
          %429 = vperm.xlu0 %428, %v414
          %v430 = vpop.permute.xlu0 %429
          %433 = vset.pattern.permute.xlu0 0
          %434 = vperm.xlu0 %433, %v415
          %v435 = vpop.permute.xlu0 %434
          %438 = vset.pattern.permute.xlu0 0
          %439 = vperm.xlu0 %438, %v416
          %v440 = vpop.permute.xlu0 %439
          %vm442 = vcmask 261120
          %v444 = vsel %vm442, %v407, 0
          %v447 = vsel %vm442, %v408, 0
          %v450 = vsel %vm442, %v409, 0
          %v453 = vsel %vm442, %v410, 0
          %v456 = vsel %vm442, %v411, 0
          %458 = vmatprep.subr.mxu0 %v400
          %459 = vmatpush1.msra.mxu0 %v399
          %460 = vmatprep.subr.mxu0 %v402
          %461 = vmatpush1.msra.mxu0 %v401
          %462 = vmatprep.subr.mxu0 %v404
          %463 = vmatpush1.msra.mxu0 %v403
          %464 = vmatprep.subr.mxu0 %v406
          %465 = vmatpush1.msra.mxu0 %v405
          %466 = vmatprep.subr.mxu0 0.0
          %467 = vmatpush1.msra.mxu0 0.0
          %468 = vmatprep.subr.mxu0 0.0
          %469 = vmatpush1.msra.mxu0 0.0
          %470 = vmatprep.subr.mxu0 0.0
          %471 = vmatpush1.msra.mxu0 0.0
          %472 = vmatprep.subr.mxu0 0.0
          %473 = vmatpush1.msra.mxu0 0.0
          %474 = vmatprep.subr.mxu0 0.0
          %475 = vmatpush1.msra.mxu0 0.0
          %476 = vmatprep.subr.mxu0 0.0
          %477 = vmatpush1.msra.mxu0 0.0
          %478 = vmatprep.subr.mxu0 0.0
          %479 = vmatpush1.msra.mxu0 0.0
          %480 = vmatprep.subr.mxu0 0.0
          %481 = vmatpush1.msra.mxu0 0.0
          %482 = vmatprep.subr.mxu0 0.0
          %483 = vmatpush1.msra.mxu0 0.0
          %484 = vmatprep.subr.mxu0 0.0
          %485 = vmatpush1.msra.mxu0 0.0
          %486 = vmatprep.subr.mxu0 0.0
          %487 = vmatpush1.msra.mxu0 0.0
          %488 = vmatprep.subr.mxu0 0.0
          %489 = vmatpush1.msra.mxu0 0.0
          %490 = vmatprep.subr.mxu0 0.0
          %491 = vmatpush1.msra.mxu0 0.0
          %492 = vmatprep.subr.mxu0 0.0
          %493 = vmatpush1.msra.mxu0 0.0
          %494 = vmatprep.subr.mxu0 0.0
          %495 = vmatpush1.msra.mxu0 0.0
          %496 = vmatprep.subr.mxu0 0.0
          %497 = vmatpush1.msra.mxu0 0.0
          %498 = vmatprep.subr.mxu0 0.0
          %499 = vmatpush1.msra.mxu0 0.0
          %500 = vmatprep.subr.mxu0 0.0
          %501 = vmatpush1.msra.mxu0 0.0
          %502 = vmatprep.subr.mxu0 0.0
          %503 = vmatpush1.msra.mxu0 0.0
          %504 = vmatprep.subr.mxu0 0.0
          %505 = vmatpush1.msra.mxu0 0.0
          %506 = vmatprep.subr.mxu0 0.0
          %507 = vmatpush1.msra.mxu0 0.0
          %508 = vmatprep.subr.mxu0 0.0
          %509 = vmatpush1.msra.mxu0 0.0
          %510 = vmatprep.subr.mxu0 0.0
          %511 = vmatpush1.msra.mxu0 0.0
          %512 = vmatprep.subr.mxu0 0.0
          %513 = vmatpush1.msra.mxu0 0.0
          %514 = vmatprep.subr.mxu0 0.0
          %515 = vmatpush1.msra.mxu0 0.0
          %516 = vmatprep.subr.mxu0 0.0
          %517 = vmatpush1.msra.mxu0 0.0
          %518 = vmatprep.subr.mxu0 0.0
          %519 = vmatpush1.msra.mxu0 0.0
          %520 = vmatprep.subr.mxu0 0.0
          %521 = vmatpush1.msra.mxu0 0.0
          %522 = vmatprep.mubr.f32.mxu0 0.0
          %523 = vmatmul.mubr.f32.gmra.mrb[0].mxu0 %v444
          %v524 = vpop.f32.mrb[0].mxu0
          %v525 = vadd.f32 %v420, %v524
          %v526 = vpop.f32.mrb[0].mxu0
          %v527 = vadd.f32 %v420, %v526
          %528 = vmatprep.mubr.f32.mxu0 0.0
          %529 = vmatmul.mubr.f32.gmra.mrb[0].mxu0 %v447
          %v530 = vpop.f32.mrb[0].mxu0
          %v531 = vadd.f32 %v425, %v530
          %v532 = vpop.f32.mrb[0].mxu0
          %v533 = vadd.f32 %v425, %v532
          %534 = vmatprep.mubr.f32.mxu0 0.0
          %535 = vmatmul.mubr.f32.gmra.mrb[0].mxu0 %v450
          %v536 = vpop.f32.mrb[0].mxu0
          %v537 = vadd.f32 %v430, %v536
          %v538 = vpop.f32.mrb[0].mxu0
          %v539 = vadd.f32 %v430, %v538
          %540 = vmatprep.mubr.f32.mxu0 0.0
          %541 = vmatmul.mubr.f32.gmra.mrb[0].mxu0 %v453
          %v542 = vpop.f32.mrb[0].mxu0
          %v543 = vadd.f32 %v435, %v542
          %v544 = vpop.f32.mrb[0].mxu0
          %v545 = vadd.f32 %v435, %v544
          %546 = vmatprep.mubr.f32.mxu0 0.0
          %547 = vmatmul.mubr.f32.gmra.mrb[0].mxu0 %v456
          %v548 = vpop.f32.mrb[0].mxu0
          %v549 = vadd.f32 %v440, %v548
          %v550 = vpop.f32.mrb[0].mxu0
          %v551 = vadd.f32 %v440, %v550
          %552 = vdwg.mxu0
          %553 = vxpose.xlu0.b32.start [1/16] %v525, 128
          %554 = vxpose.xlu0.b32.cont [2/16] 0.0, 128
          %555 = vxpose.xlu0.b32.cont [3/16] 0.0, 128
          %556 = vxpose.xlu0.b32.cont [4/16] 0.0, 128
          %557 = vxpose.xlu0.b32.cont [5/16] 0.0, 128
          %558 = vxpose.xlu0.b32.cont [6/16] 0.0, 128
          %559 = vxpose.xlu0.b32.cont [7/16] 0.0, 128
          %560 = vxpose.xlu0.b32.cont [8/16] 0.0, 128
          %561 = vxpose.xlu0.b32.cont [9/16] 0.0, 128
          %562 = vxpose.xlu0.b32.cont [10/16] 0.0, 128
          %563 = vxpose.xlu0.b32.cont [11/16] 0.0, 128
          %564 = vxpose.xlu0.b32.cont [12/16] 0.0, 128
          %565 = vxpose.xlu0.b32.cont [13/16] 0.0, 128
          %566 = vxpose.xlu0.b32.cont [14/16] 0.0, 128
          %567 = vxpose.xlu0.b32.cont [15/16] 0.0, 128
          %568 = vxpose.xlu0.b32.end [16/16] 0.0, 128
          %v569 = vpop.trf.xlu0
          %v570 = vpop.trf.xlu0
          %v571 = vpop.trf.xlu0
          %v572 = vpop.trf.xlu0
          %v573 = vpop.trf.xlu0
          %v574 = vpop.trf.xlu0
          %v575 = vpop.trf.xlu0
          %v576 = vpop.trf.xlu0
          %v577 = vpop.trf.xlu0
          %v578 = vpop.trf.xlu0
          %v579 = vpop.trf.xlu0
          %v580 = vpop.trf.xlu0
          %v581 = vpop.trf.xlu0
          %v582 = vpop.trf.xlu0
          %v583 = vpop.trf.xlu0
          %v584 = vpop.trf.xlu0
          %585 = vxpose.xlu0.b32.start [1/16] %v527, 128
          %586 = vxpose.xlu0.b32.cont [2/16] 0.0, 128
          %587 = vxpose.xlu0.b32.cont [3/16] 0.0, 128
          %588 = vxpose.xlu0.b32.cont [4/16] 0.0, 128
          %589 = vxpose.xlu0.b32.cont [5/16] 0.0, 128
          %590 = vxpose.xlu0.b32.cont [6/16] 0.0, 128
          %591 = vxpose.xlu0.b32.cont [7/16] 0.0, 128
          %592 = vxpose.xlu0.b32.cont [8/16] 0.0, 128
          %593 = vxpose.xlu0.b32.cont [9/16] 0.0, 128
          %594 = vxpose.xlu0.b32.cont [10/16] 0.0, 128
          %595 = vxpose.xlu0.b32.cont [11/16] 0.0, 128
          %596 = vxpose.xlu0.b32.cont [12/16] 0.0, 128
          %597 = vxpose.xlu0.b32.cont [13/16] 0.0, 128
          %598 = vxpose.xlu0.b32.cont [14/16] 0.0, 128
          %599 = vxpose.xlu0.b32.cont [15/16] 0.0, 128
          %600 = vxpose.xlu0.b32.end [16/16] 0.0, 128
          %v601 = vpop.trf.xlu0
          %v602 = vpop.trf.xlu0
          %v603 = vpop.trf.xlu0
          %v604 = vpop.trf.xlu0
          %v605 = vpop.trf.xlu0
          %v606 = vpop.trf.xlu0
          %v607 = vpop.trf.xlu0
          %v608 = vpop.trf.xlu0
          %v609 = vpop.trf.xlu0
          %v610 = vpop.trf.xlu0
          %v611 = vpop.trf.xlu0
          %v612 = vpop.trf.xlu0
          %v613 = vpop.trf.xlu0
          %v614 = vpop.trf.xlu0
          %v615 = vpop.trf.xlu0
          %v616 = vpop.trf.xlu0
          %vm617 = vcmask 64512
          %618 = vst.msk [vmem:[#allocation2] sm:$0xff] %vm617, %v569
          %619 = vst.msk [vmem:[#allocation2 + $0x8] sm:$0xff] %vm617, %v570
          %620 = vst.msk [vmem:[#allocation2 + $0x10] sm:$0xff] %vm617, %v571
          %621 = vst.msk [vmem:[#allocation2 + $0x18] sm:$0xff] %vm617, %v572
          %622 = vst.msk [vmem:[#allocation2 + $0x20] sm:$0xff] %vm617, %v573
          %623 = vst.msk [vmem:[#allocation2 + $0x28] sm:$0xff] %vm617, %v574
          %624 = vst.msk [vmem:[#allocation2 + $0x30] sm:$0xff] %vm617, %v575
          %625 = vst.msk [vmem:[#allocation2 + $0x38] sm:$0xff] %vm617, %v576
          %626 = vst.msk [vmem:[#allocation2 + $0x40] sm:$0xff] %vm617, %v577
          %627 = vst.msk [vmem:[#allocation2 + $0x48] sm:$0xff] %vm617, %v578
          %628 = vst.msk [vmem:[#allocation2 + $0x50] sm:$0xff] %vm617, %v579
          %629 = vst.msk [vmem:[#allocation2 + $0x58] sm:$0xff] %vm617, %v580
          %630 = vst.msk [vmem:[#allocation2 + $0x60] sm:$0xff] %vm617, %v581
          %631 = vst.msk [vmem:[#allocation2 + $0x68] sm:$0xff] %vm617, %v582
          %632 = vst.msk [vmem:[#allocation2 + $0x70] sm:$0xff] %vm617, %v583
          %633 = vst.msk [vmem:[#allocation2 + $0x78] sm:$0xff] %vm617, %v584
          %634 = vst.msk [vmem:[#allocation2 + $0x80] sm:$0xff] %vm617, %v601
          %635 = vst.msk [vmem:[#allocation2 + $0x88] sm:$0xff] %vm617, %v602
          %636 = vst.msk [vmem:[#allocation2 + $0x90] sm:$0xff] %vm617, %v603
          %637 = vst.msk [vmem:[#allocation2 + $0x98] sm:$0xff] %vm617, %v604
          %638 = vst.msk [vmem:[#allocation2 + $0xa0] sm:$0xff] %vm617, %v605
          %639 = vst.msk [vmem:[#allocation2 + $0xa8] sm:$0xff] %vm617, %v606
          %640 = vst.msk [vmem:[#allocation2 + $0xb0] sm:$0xff] %vm617, %v607
          %641 = vst.msk [vmem:[#allocation2 + $0xb8] sm:$0xff] %vm617, %v608
          %642 = vst.msk [vmem:[#allocation2 + $0xc0] sm:$0xff] %vm617, %v609
          %643 = vst.msk [vmem:[#allocation2 + $0xc8] sm:$0xff] %vm617, %v610
          %644 = vst.msk [vmem:[#allocation2 + $0xd0] sm:$0xff] %vm617, %v611
          %645 = vst.msk [vmem:[#allocation2 + $0xd8] sm:$0xff] %vm617, %v612
          %646 = vst.msk [vmem:[#allocation2 + $0xe0] sm:$0xff] %vm617, %v613
          %647 = vst.msk [vmem:[#allocation2 + $0xe8] sm:$0xff] %vm617, %v614
          %648 = vst.msk [vmem:[#allocation2 + $0xf0] sm:$0xff] %vm617, %v615
          %649 = vst.msk [vmem:[#allocation2 + $0xf8] sm:$0xff] %vm617, %v616
          %650 = vst [vmem:[#allocation3] sm:$0xff] %v531
          %651 = vst [vmem:[#allocation3 + $0x8] sm:$0xff] %v533
          %652 = vst [vmem:[#allocation3 + $0x10] sm:$0xff] %v537
          %653 = vst [vmem:[#allocation3 + $0x18] sm:$0xff] %v539
          %654 = vst [vmem:[#allocation3 + $0x20] sm:$0xff] %v543
          %655 = vst [vmem:[#allocation3 + $0x28] sm:$0xff] %v545
          %656 = vst [vmem:[#allocation3 + $0x30] sm:$0xff] %v549
          %657 = vst [vmem:[#allocation3 + $0x38] sm:$0xff] %v551
        $region98: #{tpu_custom_call.1} parent=81 // pred_fallthru
          _
        %v658 = vld [vmem:[%s357] sm:$0xff]
        %v659 = vld [vmem:[%s357 + $0x8] sm:$0xff]
        %v660 = vld [vmem:[%s357 + $0x10] sm:$0xff]
        %v661 = vld [vmem:[%s357 + $0x18] sm:$0xff]
        %v662 = vld [vmem:[#allocation9] sm:$0xff]
        %v663 = vld [vmem:[%s3] sm:$0xff]
        %665 = vset.pattern.permute.xlu0 0
        %666 = vperm.xlu0 %665, %v663
        %v667 = vpop.permute.xlu0 %666
        %vm669 = vcmask 261120
        %v671 = vsel %vm669, %v662, 0
        %673 = vmatprep.subr.mxu0 0.0
        %674 = vmatpush1.msra.mxu0 %v658
        %675 = vmatprep.subr.mxu0 0.0
        %676 = vmatpush1.msra.mxu0 %v659
        %677 = vmatprep.subr.mxu0 0.0
        %678 = vmatpush1.msra.mxu0 %v660
        %679 = vmatprep.subr.mxu0 0.0
        %680 = vmatpush1.msra.mxu0 %v661
        %681 = vmatprep.subr.mxu0 0.0
        %682 = vmatpush1.msra.mxu0 0.0
        %683 = vmatprep.subr.mxu0 0.0
        %684 = vmatpush1.msra.mxu0 0.0
        %685 = vmatprep.subr.mxu0 0.0
        %686 = vmatpush1.msra.mxu0 0.0
        %687 = vmatprep.subr.mxu0 0.0
        %688 = vmatpush1.msra.mxu0 0.0
        %689 = vmatprep.subr.mxu0 0.0
        %690 = vmatpush1.msra.mxu0 0.0
        %691 = vmatprep.subr.mxu0 0.0
        %692 = vmatpush1.msra.mxu0 0.0
        %693 = vmatprep.subr.mxu0 0.0
        %694 = vmatpush1.msra.mxu0 0.0
        %695 = vmatprep.subr.mxu0 0.0
        %696 = vmatpush1.msra.mxu0 0.0
        %697 = vmatprep.subr.mxu0 0.0
        %698 = vmatpush1.msra.mxu0 0.0
        %699 = vmatprep.subr.mxu0 0.0
        %700 = vmatpush1.msra.mxu0 0.0
        %701 = vmatprep.subr.mxu0 0.0
        %702 = vmatpush1.msra.mxu0 0.0
        %703 = vmatprep.subr.mxu0 0.0
        %704 = vmatpush1.msra.mxu0 0.0
        %705 = vmatprep.subr.mxu0 0.0
        %706 = vmatpush1.msra.mxu0 0.0
        %707 = vmatprep.subr.mxu0 0.0
        %708 = vmatpush1.msra.mxu0 0.0
        %709 = vmatprep.subr.mxu0 0.0
        %710 = vmatpush1.msra.mxu0 0.0
        %711 = vmatprep.subr.mxu0 0.0
        %712 = vmatpush1.msra.mxu0 0.0
        %713 = vmatprep.subr.mxu0 0.0
        %714 = vmatpush1.msra.mxu0 0.0
        %715 = vmatprep.subr.mxu0 0.0
        %716 = vmatpush1.msra.mxu0 0.0
        %717 = vmatprep.subr.mxu0 0.0
        %718 = vmatpush1.msra.mxu0 0.0
        %719 = vmatprep.subr.mxu0 0.0
        %720 = vmatpush1.msra.mxu0 0.0
        %721 = vmatprep.subr.mxu0 0.0
        %722 = vmatpush1.msra.mxu0 0.0
        %723 = vmatprep.subr.mxu0 0.0
        %724 = vmatpush1.msra.mxu0 0.0
        %725 = vmatprep.subr.mxu0 0.0
        %726 = vmatpush1.msra.mxu0 0.0
        %727 = vmatprep.subr.mxu0 0.0
        %728 = vmatpush1.msra.mxu0 0.0
        %729 = vmatprep.subr.mxu0 0.0
        %730 = vmatpush1.msra.mxu0 0.0
        %731 = vmatprep.subr.mxu0 0.0
        %732 = vmatpush1.msra.mxu0 0.0
        %733 = vmatprep.subr.mxu0 0.0
        %734 = vmatpush1.msra.mxu0 0.0
        %735 = vmatprep.subr.mxu0 0.0
        %736 = vmatpush1.msra.mxu0 0.0
        %737 = vmatprep.mubr.f32.mxu0 0.0
        %738 = vmatmul.mubr.f32.gmra.mrb[0].mxu0 %v671
        %v739 = vpop.f32.mrb[0].mxu0
        %v740 = vadd.f32 %v667, %v739
        %v741 = vpop.f32.mrb[0].mxu0
        %742 = vdwg.mxu0
        %v743 = vld [vmem:[#allocation2] sm:$0xff]
        %v744 = vld [vmem:[#allocation2 + $0x8] sm:$0xff]
        %v745 = vld [vmem:[#allocation2 + $0x10] sm:$0xff]
        %v746 = vld [vmem:[#allocation2 + $0x18] sm:$0xff]
        %v747 = vld [vmem:[#allocation2 + $0x20] sm:$0xff]
        %v748 = vld [vmem:[#allocation2 + $0x28] sm:$0xff]
        %v749 = vld [vmem:[#allocation2 + $0x30] sm:$0xff]
        %v750 = vld [vmem:[#allocation2 + $0x38] sm:$0xff]
        %v751 = vld [vmem:[#allocation2 + $0x40] sm:$0xff]
        %v752 = vld [vmem:[#allocation2 + $0x48] sm:$0xff]
        %v753 = vld [vmem:[#allocation2 + $0x50] sm:$0xff]
        %v754 = vld [vmem:[#allocation2 + $0x58] sm:$0xff]
        %v755 = vld [vmem:[#allocation2 + $0x60] sm:$0xff]
        %v756 = vld [vmem:[#allocation2 + $0x68] sm:$0xff]
        %v757 = vld [vmem:[#allocation2 + $0x70] sm:$0xff]
        %v758 = vld [vmem:[#allocation2 + $0x78] sm:$0xff]
        %v759 = vld [vmem:[#allocation2 + $0x80] sm:$0xff]
        %v760 = vld [vmem:[#allocation2 + $0x88] sm:$0xff]
        %v761 = vld [vmem:[#allocation2 + $0x90] sm:$0xff]
        %v762 = vld [vmem:[#allocation2 + $0x98] sm:$0xff]
        %v763 = vld [vmem:[#allocation2 + $0xa0] sm:$0xff]
        %v764 = vld [vmem:[#allocation2 + $0xa8] sm:$0xff]
        %v765 = vld [vmem:[#allocation2 + $0xb0] sm:$0xff]
        %v766 = vld [vmem:[#allocation2 + $0xb8] sm:$0xff]
        %v767 = vld [vmem:[#allocation2 + $0xc0] sm:$0xff]
        %v768 = vld [vmem:[#allocation2 + $0xc8] sm:$0xff]
        %v769 = vld [vmem:[#allocation2 + $0xd0] sm:$0xff]
        %v770 = vld [vmem:[#allocation2 + $0xd8] sm:$0xff]
        %v771 = vld [vmem:[#allocation2 + $0xe0] sm:$0xff]
        %v772 = vld [vmem:[#allocation2 + $0xe8] sm:$0xff]
        %v773 = vld [vmem:[#allocation2 + $0xf0] sm:$0xff]
        %v774 = vld [vmem:[#allocation2 + $0xf8] sm:$0xff]
        %vm775 = vcmask 64512
        %v777 = vsel %vm775, %v743, 0
        %v780 = vsel %vm775, %v744, 0
        %v783 = vsel %vm775, %v745, 0
        %v786 = vsel %vm775, %v746, 0
        %v789 = vsel %vm775, %v747, 0
        %v792 = vsel %vm775, %v748, 0
        %v795 = vsel %vm775, %v749, 0
        %v798 = vsel %vm775, %v750, 0
        %v801 = vsel %vm775, %v751, 0
        %v804 = vsel %vm775, %v752, 0
        %v807 = vsel %vm775, %v753, 0
        %v810 = vsel %vm775, %v754, 0
        %v813 = vsel %vm775, %v755, 0
        %v816 = vsel %vm775, %v756, 0
        %v819 = vsel %vm775, %v757, 0
        %v822 = vsel %vm775, %v758, 0
        %v825 = vsel %vm775, %v759, 0
        %v828 = vsel %vm775, %v760, 0
        %v831 = vsel %vm775, %v761, 0
        %v834 = vsel %vm775, %v762, 0
        %v837 = vsel %vm775, %v763, 0
        %v840 = vsel %vm775, %v764, 0
        %v843 = vsel %vm775, %v765, 0
        %v846 = vsel %vm775, %v766, 0
        %v849 = vsel %vm775, %v767, 0
        %v852 = vsel %vm775, %v768, 0
        %v855 = vsel %vm775, %v769, 0
        %v858 = vsel %vm775, %v770, 0
        %v861 = vsel %vm775, %v771, 0
        %v864 = vsel %vm775, %v772, 0
        %v867 = vsel %vm775, %v773, 0
        %v870 = vsel %vm775, %v774, 0
        %872 = vmatprep.subr.mxu0 0.0
        %873 = vmatpush1.msra.mxu0 %v740
        %874 = vmatprep.subr.mxu0 0.0
        %875 = vmatpush1.msra.mxu0 0.0
        %876 = vmatprep.subr.mxu0 0.0
        %877 = vmatpush1.msra.mxu0 0.0
        %878 = vmatprep.subr.mxu0 0.0
        %879 = vmatpush1.msra.mxu0 0.0
        %880 = vmatprep.subr.mxu0 0.0
        %881 = vmatpush1.msra.mxu0 0.0
        %882 = vmatprep.subr.mxu0 0.0
        %883 = vmatpush1.msra.mxu0 0.0
        %884 = vmatprep.subr.mxu0 0.0
        %885 = vmatpush1.msra.mxu0 0.0
        %886 = vmatprep.subr.mxu0 0.0
        %887 = vmatpush1.msra.mxu0 0.0
        %888 = vmatprep.subr.mxu0 0.0
        %889 = vmatpush1.msra.mxu0 0.0
        %890 = vmatprep.subr.mxu0 0.0
        %891 = vmatpush1.msra.mxu0 0.0
        %892 = vmatprep.subr.mxu0 0.0
        %893 = vmatpush1.msra.mxu0 0.0
        %894 = vmatprep.subr.mxu0 0.0
        %895 = vmatpush1.msra.mxu0 0.0
        %896 = vmatprep.subr.mxu0 0.0
        %897 = vmatpush1.msra.mxu0 0.0
        %898 = vmatprep.subr.mxu0 0.0
        %899 = vmatpush1.msra.mxu0 0.0
        %900 = vmatprep.subr.mxu0 0.0
        %901 = vmatpush1.msra.mxu0 0.0
        %902 = vmatprep.subr.mxu0 0.0
        %903 = vmatpush1.msra.mxu0 0.0
        %904 = vmatprep.subr.mxu0 0.0
        %905 = vmatpush1.msra.mxu0 0.0
        %906 = vmatprep.subr.mxu0 0.0
        %907 = vmatpush1.msra.mxu0 0.0
        %908 = vmatprep.subr.mxu0 0.0
        %909 = vmatpush1.msra.mxu0 0.0
        %910 = vmatprep.subr.mxu0 0.0
        %911 = vmatpush1.msra.mxu0 0.0
        %912 = vmatprep.subr.mxu0 0.0
        %913 = vmatpush1.msra.mxu0 0.0
        %914 = vmatprep.subr.mxu0 0.0
        %915 = vmatpush1.msra.mxu0 0.0
        %916 = vmatprep.subr.mxu0 0.0
        %917 = vmatpush1.msra.mxu0 0.0
        %918 = vmatprep.subr.mxu0 0.0
        %919 = vmatpush1.msra.mxu0 0.0
        %920 = vmatprep.subr.mxu0 0.0
        %921 = vmatpush1.msra.mxu0 0.0
        %922 = vmatprep.subr.mxu0 0.0
        %923 = vmatpush1.msra.mxu0 0.0
        %924 = vmatprep.subr.mxu0 0.0
        %925 = vmatpush1.msra.mxu0 0.0
        %926 = vmatprep.subr.mxu0 0.0
        %927 = vmatpush1.msra.mxu0 0.0
        %928 = vmatprep.subr.mxu0 0.0
        %929 = vmatpush1.msra.mxu0 0.0
        %930 = vmatprep.subr.mxu0 0.0
        %931 = vmatpush1.msra.mxu0 0.0
        %932 = vmatprep.subr.mxu0 0.0
        %933 = vmatpush1.msra.mxu0 0.0
        %934 = vmatprep.subr.mxu0 0.0
        %935 = vmatpush1.msra.mxu0 0.0
        %936 = vmatprep.mubr.f32.mxu0 0.0
        %937 = vmatmul.mubr.f32.gmra.mrb[0].mxu0 %v777
        %v938 = vpop.f32.mrb[0].mxu0
        %v939 = vadd.f32 0.0, %v938
        %v940 = vpop.f32.mrb[0].mxu0
        %941 = vmatprep.mubr.f32.mxu0 0.0
        %942 = vmatmul.mubr.f32.gmra.mrb[0].mxu0 %v780
        %v943 = vpop.f32.mrb[0].mxu0
        %v944 = vadd.f32 0.0, %v943
        %v945 = vpop.f32.mrb[0].mxu0
        %946 = vmatprep.mubr.f32.mxu0 0.0
        %947 = vmatmul.mubr.f32.gmra.mrb[0].mxu0 %v783
        %v948 = vpop.f32.mrb[0].mxu0
        %v949 = vadd.f32 0.0, %v948
        %v950 = vpop.f32.mrb[0].mxu0
        %951 = vmatprep.mubr.f32.mxu0 0.0
        %952 = vmatmul.mubr.f32.gmra.mrb[0].mxu0 %v786
        %v953 = vpop.f32.mrb[0].mxu0
        %v954 = vadd.f32 0.0, %v953
        %v955 = vpop.f32.mrb[0].mxu0
        %956 = vmatprep.mubr.f32.mxu0 0.0
        %957 = vmatmul.mubr.f32.gmra.mrb[0].mxu0 %v789
        %v958 = vpop.f32.mrb[0].mxu0
        %v959 = vadd.f32 0.0, %v958
        %v960 = vpop.f32.mrb[0].mxu0
        %961 = vmatprep.mubr.f32.mxu0 0.0
        %962 = vmatmul.mubr.f32.gmra.mrb[0].mxu0 %v792
        %v963 = vpop.f32.mrb[0].mxu0
        %v964 = vadd.f32 0.0, %v963
        %v965 = vpop.f32.mrb[0].mxu0
        %966 = vmatprep.mubr.f32.mxu0 0.0
        %967 = vmatmul.mubr.f32.gmra.mrb[0].mxu0 %v795
        %v968 = vpop.f32.mrb[0].mxu0
        %v969 = vadd.f32 0.0, %v968
        %v970 = vpop.f32.mrb[0].mxu0
        %971 = vmatprep.mubr.f32.mxu0 0.0
        %972 = vmatmul.mubr.f32.gmra.mrb[0].mxu0 %v798
        %v973 = vpop.f32.mrb[0].mxu0
        %v974 = vadd.f32 0.0, %v973
        %v975 = vpop.f32.mrb[0].mxu0
        %976 = vmatprep.mubr.f32.mxu0 0.0
        %977 = vmatmul.mubr.f32.gmra.mrb[0].mxu0 %v801
        %v978 = vpop.f32.mrb[0].mxu0
        %v979 = vadd.f32 0.0, %v978
        %v980 = vpop.f32.mrb[0].mxu0
        %981 = vmatprep.mubr.f32.mxu0 0.0
        %982 = vmatmul.mubr.f32.gmra.mrb[0].mxu0 %v804
        %v983 = vpop.f32.mrb[0].mxu0
        %v984 = vadd.f32 0.0, %v983
        %v985 = vpop.f32.mrb[0].mxu0
        %986 = vmatprep.mubr.f32.mxu0 0.0
        %987 = vmatmul.mubr.f32.gmra.mrb[0].mxu0 %v807
        %v988 = vpop.f32.mrb[0].mxu0
        %v989 = vadd.f32 0.0, %v988
        %v990 = vpop.f32.mrb[0].mxu0
        %991 = vmatprep.mubr.f32.mxu0 0.0
        %992 = vmatmul.mubr.f32.gmra.mrb[0].mxu0 %v810
        %v993 = vpop.f32.mrb[0].mxu0
        %v994 = vadd.f32 0.0, %v993
        %v995 = vpop.f32.mrb[0].mxu0
        %996 = vmatprep.mubr.f32.mxu0 0.0
        %997 = vmatmul.mubr.f32.gmra.mrb[0].mxu0 %v813
        %v998 = vpop.f32.mrb[0].mxu0
        %v999 = vadd.f32 0.0, %v998
        %v1000 = vpop.f32.mrb[0].mxu0
        %1001 = vmatprep.mubr.f32.mxu0 0.0
        %1002 = vmatmul.mubr.f32.gmra.mrb[0].mxu0 %v816
        %v1003 = vpop.f32.mrb[0].mxu0
        %v1004 = vadd.f32 0.0, %v1003
        %v1005 = vpop.f32.mrb[0].mxu0
        %1006 = vmatprep.mubr.f32.mxu0 0.0
        %1007 = vmatmul.mubr.f32.gmra.mrb[0].mxu0 %v819
        %v1008 = vpop.f32.mrb[0].mxu0
        %v1009 = vadd.f32 0.0, %v1008
        %v1010 = vpop.f32.mrb[0].mxu0
        %1011 = vmatprep.mubr.f32.mxu0 0.0
        %1012 = vmatmul.mubr.f32.gmra.mrb[0].mxu0 %v822
        %v1013 = vpop.f32.mrb[0].mxu0
        %v1014 = vadd.f32 0.0, %v1013
        %v1015 = vpop.f32.mrb[0].mxu0
        %1016 = vmatprep.mubr.f32.mxu0 0.0
        %1017 = vmatmul.mubr.f32.gmra.mrb[0].mxu0 %v825
        %v1018 = vpop.f32.mrb[0].mxu0
        %v1019 = vadd.f32 0.0, %v1018
        %v1020 = vpop.f32.mrb[0].mxu0
        %1021 = vmatprep.mubr.f32.mxu0 0.0
        %1022 = vmatmul.mubr.f32.gmra.mrb[0].mxu0 %v828
        %v1023 = vpop.f32.mrb[0].mxu0
        %v1024 = vadd.f32 0.0, %v1023
        %v1025 = vpop.f32.mrb[0].mxu0
        %1026 = vmatprep.mubr.f32.mxu0 0.0
        %1027 = vmatmul.mubr.f32.gmra.mrb[0].mxu0 %v831
        %v1028 = vpop.f32.mrb[0].mxu0
        %v1029 = vadd.f32 0.0, %v1028
        %v1030 = vpop.f32.mrb[0].mxu0
        %1031 = vmatprep.mubr.f32.mxu0 0.0
        %1032 = vmatmul.mubr.f32.gmra.mrb[0].mxu0 %v834
        %v1033 = vpop.f32.mrb[0].mxu0
        %v1034 = vadd.f32 0.0, %v1033
        %v1035 = vpop.f32.mrb[0].mxu0
        %1036 = vmatprep.mubr.f32.mxu0 0.0
        %1037 = vmatmul.mubr.f32.gmra.mrb[0].mxu0 %v837
        %v1038 = vpop.f32.mrb[0].mxu0
        %v1039 = vadd.f32 0.0, %v1038
        %v1040 = vpop.f32.mrb[0].mxu0
        %1041 = vmatprep.mubr.f32.mxu0 0.0
        %1042 = vmatmul.mubr.f32.gmra.mrb[0].mxu0 %v840
        %v1043 = vpop.f32.mrb[0].mxu0
        %v1044 = vadd.f32 0.0, %v1043
        %v1045 = vpop.f32.mrb[0].mxu0
        %1046 = vmatprep.mubr.f32.mxu0 0.0
        %1047 = vmatmul.mubr.f32.gmra.mrb[0].mxu0 %v843
        %v1048 = vpop.f32.mrb[0].mxu0
        %v1049 = vadd.f32 0.0, %v1048
        %v1050 = vpop.f32.mrb[0].mxu0
        %1051 = vmatprep.mubr.f32.mxu0 0.0
        %1052 = vmatmul.mubr.f32.gmra.mrb[0].mxu0 %v846
        %v1053 = vpop.f32.mrb[0].mxu0
        %v1054 = vadd.f32 0.0, %v1053
        %v1055 = vpop.f32.mrb[0].mxu0
        %1056 = vmatprep.mubr.f32.mxu0 0.0
        %1057 = vmatmul.mubr.f32.gmra.mrb[0].mxu0 %v849
        %v1058 = vpop.f32.mrb[0].mxu0
        %v1059 = vadd.f32 0.0, %v1058
        %v1060 = vpop.f32.mrb[0].mxu0
        %1061 = vmatprep.mubr.f32.mxu0 0.0
        %1062 = vmatmul.mubr.f32.gmra.mrb[0].mxu0 %v852
        %v1063 = vpop.f32.mrb[0].mxu0
        %v1064 = vadd.f32 0.0, %v1063
        %v1065 = vpop.f32.mrb[0].mxu0
        %1066 = vmatprep.mubr.f32.mxu0 0.0
        %1067 = vmatmul.mubr.f32.gmra.mrb[0].mxu0 %v855
        %v1068 = vpop.f32.mrb[0].mxu0
        %v1069 = vadd.f32 0.0, %v1068
        %v1070 = vpop.f32.mrb[0].mxu0
        %1071 = vmatprep.mubr.f32.mxu0 0.0
        %1072 = vmatmul.mubr.f32.gmra.mrb[0].mxu0 %v858
        %v1073 = vpop.f32.mrb[0].mxu0
        %v1074 = vadd.f32 0.0, %v1073
        %v1075 = vpop.f32.mrb[0].mxu0
        %1076 = vmatprep.mubr.f32.mxu0 0.0
        %1077 = vmatmul.mubr.f32.gmra.mrb[0].mxu0 %v861
        %v1078 = vpop.f32.mrb[0].mxu0
        %v1079 = vadd.f32 0.0, %v1078
        %v1080 = vpop.f32.mrb[0].mxu0
        %1081 = vmatprep.mubr.f32.mxu0 0.0
        %1082 = vmatmul.mubr.f32.gmra.mrb[0].mxu0 %v864
        %v1083 = vpop.f32.mrb[0].mxu0
        %v1084 = vadd.f32 0.0, %v1083
        %v1085 = vpop.f32.mrb[0].mxu0
        %1086 = vmatprep.mubr.f32.mxu0 0.0
        %1087 = vmatmul.mubr.f32.gmra.mrb[0].mxu0 %v867
        %v1088 = vpop.f32.mrb[0].mxu0
        %v1089 = vadd.f32 0.0, %v1088
        %v1090 = vpop.f32.mrb[0].mxu0
        %1091 = vmatprep.mubr.f32.mxu0 0.0
        %1092 = vmatmul.mubr.f32.gmra.mrb[0].mxu0 %v870
        %v1093 = vpop.f32.mrb[0].mxu0
        %v1094 = vadd.f32 0.0, %v1093
        %v1095 = vpop.f32.mrb[0].mxu0
        %1096 = vdwg.mxu0
        %v1097 = vmax.f32 %v939, %v959
        %v1098 = vmax.f32 %v944, %v964
        %v1099 = vmax.f32 %v949, %v969
        %v1100 = vmax.f32 %v954, %v974
        %v1101 = vmax.f32 %v1097, %v979
        %v1102 = vmax.f32 %v1098, %v984
        %v1103 = vmax.f32 %v1099, %v989
        %v1104 = vmax.f32 %v1100, %v994
        %v1105 = vmax.f32 %v1101, %v999
        %v1106 = vmax.f32 %v1102, %v1004
        %v1107 = vmax.f32 %v1103, %v1009
        %v1108 = vmax.f32 %v1104, %v1014
        %v1109 = vmax.f32 %v1105, %v1019
        %v1110 = vmax.f32 %v1106, %v1024
        %v1111 = vmax.f32 %v1107, %v1029
        %v1112 = vmax.f32 %v1108, %v1034
        %v1113 = vmax.f32 %v1109, %v1039
        %v1114 = vmax.f32 %v1110, %v1044
        %v1115 = vmax.f32 %v1111, %v1049
        %v1116 = vmax.f32 %v1112, %v1054
        %v1117 = vmax.f32 %v1113, %v1059
        %v1118 = vmax.f32 %v1114, %v1064
        %v1119 = vmax.f32 %v1115, %v1069
        %v1120 = vmax.f32 %v1116, %v1074
        %v1121 = vmax.f32 %v1117, %v1079
        %v1122 = vmax.f32 %v1118, %v1084
        %v1123 = vmax.f32 %v1119, %v1089
        %v1124 = vmax.f32 %v1120, %v1094
        %v1125 = vmax.f32 %v1121, %v1122
        %v1126 = vmax.f32 %v1123, %v1124
        %v1127 = vmax.f32 %v1125, %v1126
        %v1128 = vrot.slane %v1127, 4
        %v1129 = vmax.f32 %v1127, %v1128
        %v1130 = vrot.slane %v1129, 2
        %v1131 = vmax.f32 %v1129, %v1130
        %v1132 = vrot.slane %v1131, 1
        %v1133 = vmax.f32 %v1131, %v1132
        %v1134 = vsub.f32 %v939, %v1133
        %v1135 = vsub.f32 %v944, %v1133
        %v1136 = vsub.f32 %v949, %v1133
        %v1137 = vsub.f32 %v954, %v1133
        %v1138 = vsub.f32 %v959, %v1133
        %v1139 = vsub.f32 %v964, %v1133
        %v1140 = vsub.f32 %v969, %v1133
        %v1141 = vsub.f32 %v974, %v1133
        %v1142 = vsub.f32 %v979, %v1133
        %v1143 = vsub.f32 %v984, %v1133
        %v1144 = vsub.f32 %v989, %v1133
        %v1145 = vsub.f32 %v994, %v1133
        %v1146 = vsub.f32 %v999, %v1133
        %v1147 = vsub.f32 %v1004, %v1133
        %v1148 = vsub.f32 %v1009, %v1133
        %v1149 = vsub.f32 %v1014, %v1133
        %v1150 = vsub.f32 %v1019, %v1133
        %v1151 = vsub.f32 %v1024, %v1133
        %v1152 = vsub.f32 %v1029, %v1133
        %v1153 = vsub.f32 %v1034, %v1133
        %v1154 = vsub.f32 %v1039, %v1133
        %v1155 = vsub.f32 %v1044, %v1133
        %v1156 = vsub.f32 %v1049, %v1133
        %v1157 = vsub.f32 %v1054, %v1133
        %v1158 = vsub.f32 %v1059, %v1133
        %v1159 = vsub.f32 %v1064, %v1133
        %v1160 = vsub.f32 %v1069, %v1133
        %v1161 = vsub.f32 %v1074, %v1133
        %v1162 = vsub.f32 %v1079, %v1133
        %v1163 = vsub.f32 %v1084, %v1133
        %v1164 = vsub.f32 %v1089, %v1133
        %v1165 = vsub.f32 %v1094, %v1133
        %v1166 = vmul.f32 %v1134, 1.442695
        %v1167 = vpow.pop %v1166
        %v1168 = vmul.f32 %v1135, 1.442695
        %v1169 = vpow.pop %v1168
        %v1170 = vmul.f32 %v1136, 1.442695
        %v1171 = vpow.pop %v1170
        %v1172 = vmul.f32 %v1137, 1.442695
        %v1173 = vpow.pop %v1172
        %v1174 = vmul.f32 %v1138, 1.442695
        %v1175 = vpow.pop %v1174
        %v1176 = vmul.f32 %v1139, 1.442695
        %v1177 = vpow.pop %v1176
        %v1178 = vmul.f32 %v1140, 1.442695
        %v1179 = vpow.pop %v1178
        %v1180 = vmul.f32 %v1141, 1.442695
        %v1181 = vpow.pop %v1180
        %v1182 = vmul.f32 %v1142, 1.442695
        %v1183 = vpow.pop %v1182
        %v1184 = vmul.f32 %v1143, 1.442695
        %v1185 = vpow.pop %v1184
        %v1186 = vmul.f32 %v1144, 1.442695
        %v1187 = vpow.pop %v1186
        %v1188 = vmul.f32 %v1145, 1.442695
        %v1189 = vpow.pop %v1188
        %v1190 = vmul.f32 %v1146, 1.442695
        %v1191 = vpow.pop %v1190
        %v1192 = vmul.f32 %v1147, 1.442695
        %v1193 = vpow.pop %v1192
        %v1194 = vmul.f32 %v1148, 1.442695
        %v1195 = vpow.pop %v1194
        %v1196 = vmul.f32 %v1149, 1.442695
        %v1197 = vpow.pop %v1196
        %v1198 = vmul.f32 %v1150, 1.442695
        %v1199 = vpow.pop %v1198
        %v1200 = vmul.f32 %v1151, 1.442695
        %v1201 = vpow.pop %v1200
        %v1202 = vmul.f32 %v1152, 1.442695
        %v1203 = vpow.pop %v1202
        %v1204 = vmul.f32 %v1153, 1.442695
        %v1205 = vpow.pop %v1204
        %v1206 = vmul.f32 %v1154, 1.442695
        %v1207 = vpow.pop %v1206
        %v1208 = vmul.f32 %v1155, 1.442695
        %v1209 = vpow.pop %v1208
        %v1210 = vmul.f32 %v1156, 1.442695
        %v1211 = vpow.pop %v1210
        %v1212 = vmul.f32 %v1157, 1.442695
        %v1213 = vpow.pop %v1212
        %v1214 = vmul.f32 %v1158, 1.442695
        %v1215 = vpow.pop %v1214
        %v1216 = vmul.f32 %v1159, 1.442695
        %v1217 = vpow.pop %v1216
        %v1218 = vmul.f32 %v1160, 1.442695
        %v1219 = vpow.pop %v1218
        %v1220 = vmul.f32 %v1161, 1.442695
        %v1221 = vpow.pop %v1220
        %v1222 = vmul.f32 %v1162, 1.442695
        %v1223 = vpow.pop %v1222
        %v1224 = vmul.f32 %v1163, 1.442695
        %v1225 = vpow.pop %v1224
        %v1226 = vmul.f32 %v1164, 1.442695
        %v1227 = vpow.pop %v1226
        %v1228 = vmul.f32 %v1165, 1.442695
        %v1229 = vpow.pop %v1228
        %v1230 = vadd.f32 %v1167, %v1169
        %v1231 = vadd.f32 %v1230, %v1171
        %v1232 = vadd.f32 %v1231, %v1173
        %v1233 = vadd.f32 %v1232, %v1175
        %v1234 = vadd.f32 %v1233, %v1177
        %v1235 = vadd.f32 %v1234, %v1179
        %v1236 = vadd.f32 %v1235, %v1181
        %v1237 = vadd.f32 %v1236, %v1183
        %v1238 = vadd.f32 %v1237, %v1185
        %v1239 = vadd.f32 %v1238, %v1187
        %v1240 = vadd.f32 %v1239, %v1189
        %v1241 = vadd.f32 %v1240, %v1191
        %v1242 = vadd.f32 %v1241, %v1193
        %v1243 = vadd.f32 %v1242, %v1195
        %v1244 = vadd.f32 %v1243, %v1197
        %v1245 = vadd.f32 %v1244, %v1199
        %v1246 = vadd.f32 %v1245, %v1201
        %v1247 = vadd.f32 %v1246, %v1203
        %v1248 = vadd.f32 %v1247, %v1205
        %v1249 = vadd.f32 %v1248, %v1207
        %v1250 = vadd.f32 %v1249, %v1209
        %v1251 = vadd.f32 %v1250, %v1211
        %v1252 = vadd.f32 %v1251, %v1213
        %v1253 = vadd.f32 %v1252, %v1215
        %v1254 = vadd.f32 %v1253, %v1217
        %v1255 = vadd.f32 %v1254, %v1219
        %v1256 = vadd.f32 %v1255, %v1221
        %v1257 = vadd.f32 %v1256, %v1223
        %v1258 = vadd.f32 %v1257, %v1225
        %v1259 = vadd.f32 %v1258, %v1227
        %v1260 = vadd.f32 %v1259, %v1229
        %v1261 = vrot.slane %v1260, 4
        %v1262 = vadd.f32 %v1260, %v1261
        %v1263 = vrot.slane %v1262, 2
        %v1264 = vadd.f32 %v1262, %v1263
        %v1265 = vrot.slane %v1264, 1
        %v1266 = vadd.f32 %v1264, %v1265
        %v1267 = vld [vmem:[#allocation3] sm:$0xff]
        %v1268 = vld [vmem:[#allocation3 + $0x8] sm:$0xff]
        %v1269 = vld [vmem:[#allocation3 + $0x10] sm:$0xff]
        %v1270 = vld [vmem:[#allocation3 + $0x18] sm:$0xff]
        %v1271 = vld [vmem:[#allocation3 + $0x20] sm:$0xff]
        %v1272 = vld [vmem:[#allocation3 + $0x28] sm:$0xff]
        %v1273 = vld [vmem:[#allocation3 + $0x30] sm:$0xff]
        %v1274 = vld [vmem:[#allocation3 + $0x38] sm:$0xff]
        %1275 = vmatprep.subr.mxu0 0.0
        %1276 = vmatpush1.msra.mxu0 %v1167
        %1277 = vmatprep.subr.mxu0 0.0
        %1278 = vmatpush1.msra.mxu0 %v1169
        %1279 = vmatprep.subr.mxu0 0.0
        %1280 = vmatpush1.msra.mxu0 %v1171
        %1281 = vmatprep.subr.mxu0 0.0
        %1282 = vmatpush1.msra.mxu0 %v1173
        %1283 = vmatprep.subr.mxu0 0.0
        %1284 = vmatpush1.msra.mxu0 %v1175
        %1285 = vmatprep.subr.mxu0 0.0
        %1286 = vmatpush1.msra.mxu0 %v1177
        %1287 = vmatprep.subr.mxu0 0.0
        %1288 = vmatpush1.msra.mxu0 %v1179
        %1289 = vmatprep.subr.mxu0 0.0
        %1290 = vmatpush1.msra.mxu0 %v1181
        %1291 = vmatprep.subr.mxu0 0.0
        %1292 = vmatpush1.msra.mxu0 %v1183
        %1293 = vmatprep.subr.mxu0 0.0
        %1294 = vmatpush1.msra.mxu0 %v1185
        %1295 = vmatprep.subr.mxu0 0.0
        %1296 = vmatpush1.msra.mxu0 %v1187
        %1297 = vmatprep.subr.mxu0 0.0
        %1298 = vmatpush1.msra.mxu0 %v1189
        %1299 = vmatprep.subr.mxu0 0.0
        %1300 = vmatpush1.msra.mxu0 %v1191
        %1301 = vmatprep.subr.mxu0 0.0
        %1302 = vmatpush1.msra.mxu0 %v1193
        %1303 = vmatprep.subr.mxu0 0.0
        %1304 = vmatpush1.msra.mxu0 %v1195
        %1305 = vmatprep.subr.mxu0 0.0
        %1306 = vmatpush1.msra.mxu0 %v1197
        %1307 = vmatprep.subr.mxu0 0.0
        %1308 = vmatpush1.msra.mxu0 %v1199
        %1309 = vmatprep.subr.mxu0 0.0
        %1310 = vmatpush1.msra.mxu0 %v1201
        %1311 = vmatprep.subr.mxu0 0.0
        %1312 = vmatpush1.msra.mxu0 %v1203
        %1313 = vmatprep.subr.mxu0 0.0
        %1314 = vmatpush1.msra.mxu0 %v1205
        %1315 = vmatprep.subr.mxu0 0.0
        %1316 = vmatpush1.msra.mxu0 %v1207
        %1317 = vmatprep.subr.mxu0 0.0
        %1318 = vmatpush1.msra.mxu0 %v1209
        %1319 = vmatprep.subr.mxu0 0.0
        %1320 = vmatpush1.msra.mxu0 %v1211
        %1321 = vmatprep.subr.mxu0 0.0
        %1322 = vmatpush1.msra.mxu0 %v1213
        %1323 = vmatprep.subr.mxu0 0.0
        %1324 = vmatpush1.msra.mxu0 %v1215
        %1325 = vmatprep.subr.mxu0 0.0
        %1326 = vmatpush1.msra.mxu0 %v1217
        %1327 = vmatprep.subr.mxu0 0.0
        %1328 = vmatpush1.msra.mxu0 %v1219
        %1329 = vmatprep.subr.mxu0 0.0
        %1330 = vmatpush1.msra.mxu0 %v1221
        %1331 = vmatprep.subr.mxu0 0.0
        %1332 = vmatpush1.msra.mxu0 %v1223
        %1333 = vmatprep.subr.mxu0 0.0
        %1334 = vmatpush1.msra.mxu0 %v1225
        %1335 = vmatprep.subr.mxu0 0.0
        %1336 = vmatpush1.msra.mxu0 %v1227
        %1337 = vmatprep.subr.mxu0 0.0
        %1338 = vmatpush1.msra.mxu0 %v1229
        %1339 = vmatprep.mubr.f32.mxu0 %v1268
        %1340 = vmatmul.mubr.f32.gmra.mrb[0].mxu0 %v1267
        %v1341 = vpop.f32.mrb[0].mxu0
        %v1342 = vadd.f32 0.0, %v1341
        %v1343 = vpop.f32.mrb[0].mxu0
        %1344 = vmatprep.mubr.f32.mxu0 %v1270
        %1345 = vmatmul.mubr.f32.gmra.mrb[0].mxu0 %v1269
        %v1346 = vpop.f32.mrb[0].mxu0
        %v1347 = vadd.f32 0.0, %v1346
        %v1348 = vpop.f32.mrb[0].mxu0
        %1349 = vmatprep.mubr.f32.mxu0 %v1272
        %1350 = vmatmul.mubr.f32.gmra.mrb[0].mxu0 %v1271
        %v1351 = vpop.f32.mrb[0].mxu0
        %v1352 = vadd.f32 0.0, %v1351
        %v1353 = vpop.f32.mrb[0].mxu0
        %1354 = vmatprep.mubr.f32.mxu0 %v1274
        %1355 = vmatmul.mubr.f32.gmra.mrb[0].mxu0 %v1273
        %v1356 = vpop.f32.mrb[0].mxu0
        %v1357 = vadd.f32 0.0, %v1356
        %v1358 = vpop.f32.mrb[0].mxu0
        %1359 = vdwg.mxu0
        %s1360 = sld [smem:[#allocation4]]
        %v1361 = vstv %s1360
        %v1362 = vrcp.pop %v1266
        %v1363 = vmul.f32 %v1361, %v1362
        %v1364 = vmul.f32 %v1342, %v1363
        %v1365 = vmul.f32 %v1347, %v1363
        %v1366 = vmul.f32 %v1352, %v1363
        %v1367 = vmul.f32 %v1357, %v1363
        %v1368 = vadd.f32 %v1364, %v658
        %v1369 = vadd.f32 %v1365, %v659
        %v1370 = vadd.f32 %v1366, %v660
        %v1371 = vadd.f32 %v1367, %v661
        %1372 = vst [vmem:[%s394] sm:$0xff] %v1368
        %1373 = vst [vmem:[%s394 + $0x8] sm:$0xff] %v1369
        %1374 = vst [vmem:[%s394 + $0x10] sm:$0xff] %v1370
        %1375 = vst [vmem:[%s394 + $0x18] sm:$0xff] %v1371
        %s1376 = sand.u32 %s207, 1
        %s1377 = scalar_lea.sflag [#allocation7], %s1376
        %s1378 = sand.u32 %s207, 1
        %s1379 = smul.addr %s1378, 32
        %s1380 = scalar_lea.vmem [#allocation11], %s1379
        // Predicated region
        $region99: #{tpu_custom_call.1} parent=81 // pred_check
          %p1381 = pneg %p217
        $region100: #{tpu_custom_call.1} parent=81 // pred_check_branch
          %1383 = sbr.rel (%p1381) target = $region102
        $region101: #{tpu_custom_call.1} parent=81 // pred_region
          %s1385 = ssub.s32 512, 512
          %1386 = vsyncadd %s1377, %s1385
          %s1387 = smul.addr %s30, 8
          %s1388 = sadd.s32 %s31, %s1387
          %s1389 = smul.addr %s1388, 128
          %s1390 = scalar_lea.hbm %s7, %s1389
          %s1391 = sshll.u32 %s1380, 4
          %s1392 = int_to_ptr.vmem [resolvable:$true] %s1391
          %1397 = dma.vmem_to_hbm [thread:$0]  %s1392, 512, %s1390, %s1377, 128, 256, 8
        $region102: #{tpu_custom_call.1} parent=81 // pred_fallthru
          _
      $region82: #{tpu_custom_call.1} parent=5 // pred_fallthru
        _
      %p1398 = scmp.le.s32.totalorder 2, %s21
      // Predicated region
      $region103: #{tpu_custom_call.1} parent=5 // pred_check
        %p1399 = pneg %p1398
      $region104: #{tpu_custom_call.1} parent=5 // pred_check_branch
        %1401 = sbr.rel (%p1399) target = $region106
      $region105: #{tpu_custom_call.1} parent=5 // pred_region
        %s1402 = ssub.s32 %s21, 2
        // Predicated region
        $region107: #{tpu_custom_call.1} parent=105 // pred_check
          %p1403 = pneg %p223
        $region108: #{tpu_custom_call.1} parent=105 // pred_check_branch
          %1405 = sbr.rel (%p1403) target = $region110
        $region109: #{tpu_custom_call.1} parent=105 // pred_region
          %s1406 = sand.u32 %s208, 1
          %s1407 = scalar_lea.sflag [#allocation7], %s1406
          %s1408 = sand.u32 %s208, 1
          %s1409 = smul.addr %s1408, 32
          %s1410 = scalar_lea.vmem [#allocation11], %s1409
          %1411 = dma.done %s1407, 512
        $region110: #{tpu_custom_call.1} parent=105 // pred_fallthru
          _
      $region106: #{tpu_custom_call.1} parent=5 // pred_fallthru
        _
    $region6: #{tpu_custom_call.1} parent=1 // loop_footer
      %s25 = sadd.s32 1, %s21
    $region7: #{tpu_custom_call.1} parent=1 // loop_footer_branch
      %20 = sbr.rel target = $region3
    $region8: #{tpu_custom_call.1} parent=1 // loop_exit
      _
    %1412 = vsyncpa [#allocation6], 1
    %s1413 = scalar_lea.sflag [#allocation6], 1
    %1414 = vsyncpa %s1413, 1
    %1415 = vsyncpa [#allocation10], 1
    %1416 = vsyncpa [#allocation7], 1
    %s1417 = scalar_lea.sflag [#allocation7], 1
    %1418 = vsyncpa %s1417, 1

</llo_original>
